<compile_context>
chip_gen: v7x
topology: tpu7x:2x2x1
jax: 0.10.0
libtpu: 0.0.40
codegen_flags: <defaults>
</compile_context>

<pallas_src>
import numpy as np

import jax
import jax.numpy as jnp
from jax.experimental import pallas as pl
from jax.experimental.pallas import tpu as pltpu


def _round_up(x, m):
    return (x + m - 1) // m * m


# --------------------------------------------------------------------------
# host-side constant builders (run once per (config, batch) at build time)
# --------------------------------------------------------------------------

def _conv_masks(h, w, n, lp):
    """(9, lp) 0/1 masks: mask[t, (hh*w+ww)*n + nn] == 1 iff the tap-t source pixel
    (hh+dy-1, ww+dx-1) lies inside the image (t = dy*3 + dx)."""
    hs = np.arange(h)[:, None]
    ws = np.arange(w)[None, :]
    masks = np.zeros((9, lp), np.float32)
    t = 0
    for dy in range(3):
        for dx in range(3):
            valid = ((hs + dy - 1 >= 0) & (hs + dy - 1 < h)
                     & (ws + dx - 1 >= 0) & (ws + dx - 1 < w))
            masks[t, : h * w * n] = np.repeat(valid.reshape(-1), n).astype(np.float32)
            t += 1
    return masks


def _pool_select(h, w, n, lp_in, lp_out):
    """0/1 matrix that gathers the top-left corner of every 2x2 window (which holds the
    window max after the two roll+max steps) into the pooled lane-dense frame."""
    ho, wo = h // 2, w // 2
    sel = np.zeros((lp_in, lp_out), np.float32)
    hi, wi, ni = np.meshgrid(np.arange(ho), np.arange(wo), np.arange(n), indexing="ij")
    src = ((2 * hi) * w + 2 * wi) * n + ni
    dst = (hi * wo + wi) * n + ni
    sel[src.reshape(-1), dst.reshape(-1)] = 1.0
    return sel


# --------------------------------------------------------------------------
# fused forward kernel
# --------------------------------------------------------------------------

def _make_forward_kernel(layers, n_batch, pf, compute_dtype):
    """layers: tuple of dicts with static per-layer geometry {'H','W','pool'}.
    n_batch: batch size folded into the lane axis.  pf: final H*W (spatial positions
    feeding the classifier)."""
    nb = n_batch

    def kernel(*refs):
        o_ref = refs[-1]
        x = refs[0][...]                                    # (Cin_p, Lp) f32
        r = 1
        for lay in layers:
            h, w = lay["H"], lay["W"]
            lp = x.shape[1]
            wm = refs[r][...]                               # (Cout_p, 9*Cin_p)
            bias = refs[r + 1][...]                         # (Cout_p, 1)
            masks = refs[r + 2][...]                        # (9, Lp)
            r += 3

            # ---- 3x3 conv as ONE matmul over a 9-tap patch matrix --------------
            taps = []
            ti = 0
            for dy in range(3):
                for dx in range(3):
                    delta = ((dy - 1) * w + (dx - 1)) * nb
                    if delta == 0:
                        shifted = x
                    else:
                        shifted = pltpu.roll(x, shift=(-delta) % lp, axis=1)
                    taps.append(shifted * masks[ti:ti + 1, :])
                    ti += 1
            patches = jnp.concatenate(taps, axis=0)         # (9*Cin_p, Lp), 8-aligned
            acc = jnp.dot(wm.astype(compute_dtype),
                          patches.astype(compute_dtype),
                          preferred_element_type=jnp.float32)
            y = jnp.maximum(acc + bias, 0.0)                # conv + bias + ReLU

            # ---- fused 2x2 / stride-2 max-pool ---------------------------------
            if lay["pool"]:
                sel = refs[r][...]                          # (Lp, Lp_out)
                r += 1
                m1 = jnp.maximum(y, pltpu.roll(y, shift=(-nb) % lp, axis=1))
                m2 = jnp.maximum(m1, pltpu.roll(m1, shift=(-(w * nb)) % lp, axis=1))
                y = jnp.dot(m2.astype(compute_dtype), sel.astype(compute_dtype),
                            preferred_element_type=jnp.float32)
            x = y

        # ---- classifier (weights pre-permuted to the kernel's flat layout) ------
        lin_w = refs[r][...]                                # (classes, pf*Cf_p)
        lin_b = refs[r + 1][...]                            # (classes, 1)
        cols = [x[:, p * nb:(p + 1) * nb] for p in range(pf)]
        flat = jnp.concatenate(cols, axis=0) if pf > 1 else cols[0]   # (pf*Cf_p, N)
        scores_t = jnp.dot(lin_w.astype(compute_dtype), flat.astype(compute_dtype),
                           preferred_element_type=jnp.float32) + lin_b
        o_ref[...] = scores_t                               # (classes, N)

    return kernel


# --------------------------------------------------------------------------
# the model
# --------------------------------------------------------------------------

class RedeConvProfundaPallas:
    """{conv3x3 - relu - [maxpool2x2]} x (L-1) -> linear, on NCHW inputs."""

    def __init__(self, dims_entrada=(3, 16, 16), num_filtros=(8, 8, 8),
                 agrups_max=(0, 1, 2), normlote=False, num_classes=10,
                 escala_peso=0.001, key=None, compute_dtype=jnp.float32):
        # TODO(synk): normlote=True (BatchNorm2d) path not implemented (module default is False).
        assert not normlote, "normlote=True not supported in this Pallas port"
        # TODO(synk): escala_peso == 'kaiming' init not implemented; use a numeric std.
        assert not isinstance(escala_peso, str)

        if key is None:
            key = jax.random.PRNGKey(0)
        C, H, W = dims_entrada
        L = len(num_filtros)
        keys = jax.random.split(key, L + 1)

        self.dims_entrada = dims_entrada
        self.num_classes = num_classes
        self.agrups_max = set(agrups_max)
        # set compute_dtype=jnp.bfloat16 to run all matmuls on the bf16 MXU path
        # (f32 accumulation); kept f32 by default for exact parity with the torch module.
        self.compute_dtype = compute_dtype

        # parameters in PyTorch layout
        self.conv_w, self.conv_b = [], []
        self.layer_geom = []                 # (cin, cout, H_in, W_in, pooled)
        cin, h, w = C, H, W
        for i, cout in enumerate(num_filtros):
            kw = escala_peso * jax.random.normal(keys[i], (cout, cin, 3, 3), jnp.float32)
            self.conv_w.append(kw)
            self.conv_b.append(jnp.zeros((cout,), jnp.float32))
            pool = i in self.agrups_max
            if pool:
                assert h % 2 == 0 and w % 2 == 0, "2x2/stride-2 pool requires even H, W"
            self.layer_geom.append((cin, cout, h, w, pool))
            cin = cout
            if pool:
                h //= 2
                w //= 2
        self.final_chw = (cin, h, w)
        feat = cin * h * w
        self.lin_w = escala_peso * jax.random.normal(keys[L], (num_classes, feat), jnp.float32)
        self.lin_b = jnp.zeros((num_classes,), jnp.float32)

        self._built = {}                     # cache: batch size -> jitted forward

    # ------------------------------------------------------------------ build
    def _build(self, n):
        C0, H0, W0 = self.dims_entrada
        classes = self.num_classes

        layers_static = []
        consts = []
        for i, (cin, cout, h, w, pool) in enumerate(self.layer_geom):
            cin_p = _round_up(cin, 8)
            cout_p = _round_up(cout, 8)
            lp = _round_up(h * w * n, 128)

            # conv weight -> (Cout_p, 9*Cin_p) with column (dy*3+dx)*Cin_p + ci
            kp = jnp.zeros((cout_p, cin_p, 3, 3), jnp.float32)
            kp = kp.at[:cout, :cin].set(self.conv_w[i])
            wm = jnp.transpose(kp, (0, 2, 3, 1)).reshape(cout_p, 9 * cin_p)
            b2 = jnp.zeros((cout_p, 1), jnp.float32).at[:cout, 0].set(self.conv_b[i])
            masks = jnp.asarray(_conv_masks(h, w, n, lp))
            consts += [wm, b2, masks]
            if pool:
                lp_out = _round_up((h // 2) * (w // 2) * n, 128)
                consts.append(jnp.asarray(_pool_select(h, w, n, lp, lp_out)))
            layers_static.append(dict(H=h, W=w, pool=pool))

        # classifier weight pre-permuted into the kernel's (p-major, c-minor) order.
        cf, hf, wf = self.final_chw
        pf = hf * wf
        cfp = _round_up(cf, 8)
        lw = self.lin_w.reshape(classes, cf, pf)
        lw = jnp.pad(lw, ((0, 0), (0, cfp - cf), (0, 0)))
        lin_w_r = jnp.transpose(lw, (0, 2, 1)).reshape(classes, pf * cfp)
        lin_b2 = self.lin_b.reshape(classes, 1)
        consts += [lin_w_r, lin_b2]
        # TODO(synk): for configs with a large un-pooled final map, the classifier
        # gather unrolls into pf column slices (fine for VGG-style all-pooled nets).

        kernel = _make_forward_kernel(tuple(layers_static), n, pf, self.compute_dtype)
        vmem = pl.BlockSpec(memory_space=pltpu.MemorySpace.VMEM)
        call = pl.pallas_call(
            kernel,
            out_shape=jax.ShapeDtypeStruct((classes, n), jnp.float32),
            in_specs=[vmem] * (1 + len(consts)),
            out_specs=vmem,
        )

        c0p = _round_up(C0, 8)
        lp0 = _round_up(H0 * W0 * n, 128)

        def fwd(X):
            # NCHW -> lane-dense (C_pad, H*W*N_pad) frame; (h, w, n) on the lane axis.
            xt = jnp.transpose(X.astype(jnp.float32), (1, 2, 3, 0)).reshape(C0, H0 * W0 * n)
            x0 = jnp.pad(xt, ((0, c0p - C0), (0, lp0 - H0 * W0 * n)))
            scores_t = call(x0, *consts)      # (classes, N)
            return scores_t.T                 # (N, classes)

        return jax.jit(fwd)

    # ---------------------------------------------------------------- forward
    def __call__(self, X):
        n = X.shape[0]
        if n not in self._built:
            self._built[n] = self._build(n)
        return self._built[n](X)


# --------------------------------------------------------------------------
# pure-JAX reference (for a correctness smoke test)
# --------------------------------------------------------------------------

def _reference_forward(model, X):
    x = X
    for i, (kw, kb) in enumerate(zip(model.conv_w, model.conv_b)):
        x = jax.lax.conv_general_dilated(
            x, kw, window_strides=(1, 1), padding=((1, 1), (1, 1)),
            dimension_numbers=("NCHW", "OIHW", "NCHW"))
        x = x + kb.reshape(1, -1, 1, 1)
        x = jnp.maximum(x, 0.0)
        if i in model.agrups_max:
            x = jax.lax.reduce_window(x, -jnp.inf, jax.lax.max,
                                      (1, 1, 2, 2), (1, 1, 2, 2), "VALID")
    flat = x.reshape(X.shape[0], -1)
    return flat @ model.lin_w.T + model.lin_b


# --------------------------------------------------------------------------
# main
# --------------------------------------------------------------------------

if __name__ == "__main__":
    key = jax.random.PRNGKey(0)
    k_x, k_p = jax.random.split(key)

    N, C, H, W = 2, 3, 16, 16
    X = jax.random.normal(k_x, (N, C, H, W), jnp.float32)  # NCHW input

    model = RedeConvProfundaPallas(
        dims_entrada=(C, H, W),
        num_filtros=(8, 8, 8),
        agrups_max=(0, 1, 2),
        normlote=False,
        num_classes=10,
        escala_peso=0.1,
        key=k_p,
    )

    scores = model(X)
    scores = jax.block_until_ready(scores)
    assert scores.shape == (N, 10), scores.shape
    assert scores.dtype == jnp.float32

    ref = jax.block_until_ready(_reference_forward(model, X))
    assert np.allclose(np.asarray(scores), np.asarray(ref), rtol=5e-2, atol=5e-3), (
        "Pallas forward does not match the pure-JAX reference")

    print("KERNEL_OK")
</pallas_src>

<mosaic_0001>
module attributes {stable_mosaic.version = 11 : i64} {
  func.func @kernel(%arg0: memref<8x512xf32, #tpu.memory_space<vmem>>, %arg1: memref<8x72xf32, #tpu.memory_space<vmem>>, %arg2: memref<8x1xf32, #tpu.memory_space<vmem>>, %arg3: memref<9x512xf32, #tpu.memory_space<vmem>>, %arg4: memref<512x128xf32, #tpu.memory_space<vmem>>, %arg5: memref<8x72xf32, #tpu.memory_space<vmem>>, %arg6: memref<8x1xf32, #tpu.memory_space<vmem>>, %arg7: memref<9x128xf32, #tpu.memory_space<vmem>>, %arg8: memref<128x128xf32, #tpu.memory_space<vmem>>, %arg9: memref<8x72xf32, #tpu.memory_space<vmem>>, %arg10: memref<8x1xf32, #tpu.memory_space<vmem>>, %arg11: memref<9x128xf32, #tpu.memory_space<vmem>>, %arg12: memref<128x128xf32, #tpu.memory_space<vmem>>, %arg13: memref<10x32xf32, #tpu.memory_space<vmem>>, %arg14: memref<10x1xf32, #tpu.memory_space<vmem>>, %arg15: memref<10x2xf32, #tpu.memory_space<vmem>>) attributes {dimension_semantics = [], scalar_prefetch = 0 : i64, scratch_operands = 0 : i64, tpu.core_type = #tpu.core_type<tc>} {
    %c0 = arith.constant 0 : index
    %c0_0 = arith.constant 0 : index
    %0 = vector.load %arg0[%c0, %c0_0] : memref<8x512xf32, #tpu.memory_space<vmem>>, vector<8x512xf32>
    %c0_1 = arith.constant 0 : index
    %c0_2 = arith.constant 0 : index
    %1 = vector.load %arg1[%c0_1, %c0_2] : memref<8x72xf32, #tpu.memory_space<vmem>>, vector<8x72xf32>
    %c0_3 = arith.constant 0 : index
    %c0_4 = arith.constant 0 : index
    %2 = vector.load %arg2[%c0_3, %c0_4] : memref<8x1xf32, #tpu.memory_space<vmem>>, vector<8x1xf32>
    %c0_5 = arith.constant 0 : index
    %c0_6 = arith.constant 0 : index
    %3 = vector.load %arg3[%c0_5, %c0_6] : memref<9x512xf32, #tpu.memory_space<vmem>>, vector<9x512xf32>
    %c34_i32 = arith.constant 34 : i32
    %4 = tpu.dynamic_rotate %0 by %c34_i32 dim 1 : vector<8x512xf32>, i32 -> vector<8x512xf32>
    %5 = vector.extract_strided_slice %3 {offsets = [0, 0], sizes = [1, 512], strides = [1, 1]} : vector<9x512xf32> to vector<1x512xf32>
    %6 = vector.broadcast %5 : vector<1x512xf32> to vector<8x512xf32>
    %7 = arith.mulf %4, %6 : vector<8x512xf32>
    %c32_i32 = arith.constant 32 : i32
    %8 = tpu.dynamic_rotate %0 by %c32_i32 dim 1 : vector<8x512xf32>, i32 -> vector<8x512xf32>
    %9 = vector.extract_strided_slice %3 {offsets = [1, 0], sizes = [1, 512], strides = [1, 1]} : vector<9x512xf32> to vector<1x512xf32>
    %10 = vector.broadcast %9 : vector<1x512xf32> to vector<8x512xf32>
    %11 = arith.mulf %8, %10 : vector<8x512xf32>
    %c30_i32 = arith.constant 30 : i32
    %12 = tpu.dynamic_rotate %0 by %c30_i32 dim 1 : vector<8x512xf32>, i32 -> vector<8x512xf32>
    %13 = vector.extract_strided_slice %3 {offsets = [2, 0], sizes = [1, 512], strides = [1, 1]} : vector<9x512xf32> to vector<1x512xf32>
    %14 = vector.broadcast %13 : vector<1x512xf32> to vector<8x512xf32>
    %15 = arith.mulf %12, %14 : vector<8x512xf32>
    %c2_i32 = arith.constant 2 : i32
    %16 = tpu.dynamic_rotate %0 by %c2_i32 dim 1 : vector<8x512xf32>, i32 -> vector<8x512xf32>
    %17 = vector.extract_strided_slice %3 {offsets = [3, 0], sizes = [1, 512], strides = [1, 1]} : vector<9x512xf32> to vector<1x512xf32>
    %18 = vector.broadcast %17 : vector<1x512xf32> to vector<8x512xf32>
    %19 = arith.mulf %16, %18 : vector<8x512xf32>
    %20 = vector.extract_strided_slice %3 {offsets = [4, 0], sizes = [1, 512], strides = [1, 1]} : vector<9x512xf32> to vector<1x512xf32>
    %21 = vector.broadcast %20 : vector<1x512xf32> to vector<8x512xf32>
    %22 = arith.mulf %0, %21 : vector<8x512xf32>
    %c510_i32 = arith.constant 510 : i32
    %23 = tpu.dynamic_rotate %0 by %c510_i32 dim 1 : vector<8x512xf32>, i32 -> vector<8x512xf32>
    %24 = vector.extract_strided_slice %3 {offsets = [5, 0], sizes = [1, 512], strides = [1, 1]} : vector<9x512xf32> to vector<1x512xf32>
    %25 = vector.broadcast %24 : vector<1x512xf32> to vector<8x512xf32>
    %26 = arith.mulf %23, %25 : vector<8x512xf32>
    %c482_i32 = arith.constant 482 : i32
    %27 = tpu.dynamic_rotate %0 by %c482_i32 dim 1 : vector<8x512xf32>, i32 -> vector<8x512xf32>
    %28 = vector.extract_strided_slice %3 {offsets = [6, 0], sizes = [1, 512], strides = [1, 1]} : vector<9x512xf32> to vector<1x512xf32>
    %29 = vector.broadcast %28 : vector<1x512xf32> to vector<8x512xf32>
    %30 = arith.mulf %27, %29 : vector<8x512xf32>
    %c480_i32 = arith.constant 480 : i32
    %31 = tpu.dynamic_rotate %0 by %c480_i32 dim 1 : vector<8x512xf32>, i32 -> vector<8x512xf32>
    %32 = vector.extract_strided_slice %3 {offsets = [7, 0], sizes = [1, 512], strides = [1, 1]} : vector<9x512xf32> to vector<1x512xf32>
    %33 = vector.broadcast %32 : vector<1x512xf32> to vector<8x512xf32>
    %34 = arith.mulf %31, %33 : vector<8x512xf32>
    %c478_i32 = arith.constant 478 : i32
    %35 = tpu.dynamic_rotate %0 by %c478_i32 dim 1 : vector<8x512xf32>, i32 -> vector<8x512xf32>
    %36 = vector.extract_strided_slice %3 {offsets = [8, 0], sizes = [1, 512], strides = [1, 1]} : vector<9x512xf32> to vector<1x512xf32>
    %37 = vector.broadcast %36 : vector<1x512xf32> to vector<8x512xf32>
    %38 = arith.mulf %35, %37 : vector<8x512xf32>
    %39 = tpu.concatenate %7, %11, %15, %19, %22, %26, %30, %34, %38 in 0 : vector<8x512xf32>, vector<8x512xf32>, vector<8x512xf32>, vector<8x512xf32>, vector<8x512xf32>, vector<8x512xf32>, vector<8x512xf32>, vector<8x512xf32>, vector<8x512xf32> -> vector<72x512xf32>
    %cst = arith.constant dense<0.000000e+00> : vector<8x512xf32>
    %40 = tpu.matmul %1, %39, %cst {dimension_numbers = #tpu.dot_dimension_numbers<[1], [0], [0], [1], [0, 0, 1, 1], [], []>} : vector<8x72xf32>, vector<72x512xf32>, vector<8x512xf32> -> vector<8x512xf32>
    %41 = vector.broadcast %2 : vector<8x1xf32> to vector<8x512xf32>
    %42 = arith.addf %40, %41 : vector<8x512xf32>
    %cst_7 = arith.constant 0.000000e+00 : f32
    %43 = vector.broadcast %cst_7 : f32 to vector<8x512xf32>
    %44 = arith.maximumf %42, %43 : vector<8x512xf32>
    %c0_8 = arith.constant 0 : index
    %c0_9 = arith.constant 0 : index
    %45 = vector.load %arg4[%c0_8, %c0_9] : memref<512x128xf32, #tpu.memory_space<vmem>>, vector<512x128xf32>
    %c510_i32_10 = arith.constant 510 : i32
    %46 = tpu.dynamic_rotate %44 by %c510_i32_10 dim 1 : vector<8x512xf32>, i32 -> vector<8x512xf32>
    %47 = arith.maximumf %44, %46 : vector<8x512xf32>
    %c480_i32_11 = arith.constant 480 : i32
    %48 = tpu.dynamic_rotate %47 by %c480_i32_11 dim 1 : vector<8x512xf32>, i32 -> vector<8x512xf32>
    %49 = arith.maximumf %47, %48 : vector<8x512xf32>
    %cst_12 = arith.constant dense<0.000000e+00> : vector<8x128xf32>
    %50 = tpu.matmul %49, %45, %cst_12 {dimension_numbers = #tpu.dot_dimension_numbers<[1], [0], [0], [1], [0, 0, 1, 1], [], []>} : vector<8x512xf32>, vector<512x128xf32>, vector<8x128xf32> -> vector<8x128xf32>
    %c0_13 = arith.constant 0 : index
    %c0_14 = arith.constant 0 : index
    %51 = vector.load %arg5[%c0_13, %c0_14] : memref<8x72xf32, #tpu.memory_space<vmem>>, vector<8x72xf32>
    %c0_15 = arith.constant 0 : index
    %c0_16 = arith.constant 0 : index
    %52 = vector.load %arg6[%c0_15, %c0_16] : memref<8x1xf32, #tpu.memory_space<vmem>>, vector<8x1xf32>
    %c0_17 = arith.constant 0 : index
    %c0_18 = arith.constant 0 : index
    %53 = vector.load %arg7[%c0_17, %c0_18] : memref<9x128xf32, #tpu.memory_space<vmem>>, vector<9x128xf32>
    %c18_i32 = arith.constant 18 : i32
    %54 = tpu.dynamic_rotate %50 by %c18_i32 dim 1 : vector<8x128xf32>, i32 -> vector<8x128xf32>
    %55 = vector.extract_strided_slice %53 {offsets = [0, 0], sizes = [1, 128], strides = [1, 1]} : vector<9x128xf32> to vector<1x128xf32>
    %56 = vector.broadcast %55 : vector<1x128xf32> to vector<8x128xf32>
    %57 = arith.mulf %54, %56 : vector<8x128xf32>
    %c16_i32 = arith.constant 16 : i32
    %58 = tpu.dynamic_rotate %50 by %c16_i32 dim 1 : vector<8x128xf32>, i32 -> vector<8x128xf32>
    %59 = vector.extract_strided_slice %53 {offsets = [1, 0], sizes = [1, 128], strides = [1, 1]} : vector<9x128xf32> to vector<1x128xf32>
    %60 = vector.broadcast %59 : vector<1x128xf32> to vector<8x128xf32>
    %61 = arith.mulf %58, %60 : vector<8x128xf32>
    %c14_i32 = arith.constant 14 : i32
    %62 = tpu.dynamic_rotate %50 by %c14_i32 dim 1 : vector<8x128xf32>, i32 -> vector<8x128xf32>
    %63 = vector.extract_strided_slice %53 {offsets = [2, 0], sizes = [1, 128], strides = [1, 1]} : vector<9x128xf32> to vector<1x128xf32>
    %64 = vector.broadcast %63 : vector<1x128xf32> to vector<8x128xf32>
    %65 = arith.mulf %62, %64 : vector<8x128xf32>
    %c2_i32_19 = arith.constant 2 : i32
    %66 = tpu.dynamic_rotate %50 by %c2_i32_19 dim 1 : vector<8x128xf32>, i32 -> vector<8x128xf32>
    %67 = vector.extract_strided_slice %53 {offsets = [3, 0], sizes = [1, 128], strides = [1, 1]} : vector<9x128xf32> to vector<1x128xf32>
    %68 = vector.broadcast %67 : vector<1x128xf32> to vector<8x128xf32>
    %69 = arith.mulf %66, %68 : vector<8x128xf32>
    %70 = vector.extract_strided_slice %53 {offsets = [4, 0], sizes = [1, 128], strides = [1, 1]} : vector<9x128xf32> to vector<1x128xf32>
    %71 = vector.broadcast %70 : vector<1x128xf32> to vector<8x128xf32>
    %72 = arith.mulf %50, %71 : vector<8x128xf32>
    %c126_i32 = arith.constant 126 : i32
    %73 = tpu.dynamic_rotate %50 by %c126_i32 dim 1 : vector<8x128xf32>, i32 -> vector<8x128xf32>
    %74 = vector.extract_strided_slice %53 {offsets = [5, 0], sizes = [1, 128], strides = [1, 1]} : vector<9x128xf32> to vector<1x128xf32>
    %75 = vector.broadcast %74 : vector<1x128xf32> to vector<8x128xf32>
    %76 = arith.mulf %73, %75 : vector<8x128xf32>
    %c114_i32 = arith.constant 114 : i32
    %77 = tpu.dynamic_rotate %50 by %c114_i32 dim 1 : vector<8x128xf32>, i32 -> vector<8x128xf32>
    %78 = vector.extract_strided_slice %53 {offsets = [6, 0], sizes = [1, 128], strides = [1, 1]} : vector<9x128xf32> to vector<1x128xf32>
    %79 = vector.broadcast %78 : vector<1x128xf32> to vector<8x128xf32>
    %80 = arith.mulf %77, %79 : vector<8x128xf32>
    %c112_i32 = arith.constant 112 : i32
    %81 = tpu.dynamic_rotate %50 by %c112_i32 dim 1 : vector<8x128xf32>, i32 -> vector<8x128xf32>
    %82 = vector.extract_strided_slice %53 {offsets = [7, 0], sizes = [1, 128], strides = [1, 1]} : vector<9x128xf32> to vector<1x128xf32>
    %83 = vector.broadcast %82 : vector<1x128xf32> to vector<8x128xf32>
    %84 = arith.mulf %81, %83 : vector<8x128xf32>
    %c110_i32 = arith.constant 110 : i32
    %85 = tpu.dynamic_rotate %50 by %c110_i32 dim 1 : vector<8x128xf32>, i32 -> vector<8x128xf32>
    %86 = vector.extract_strided_slice %53 {offsets = [8, 0], sizes = [1, 128], strides = [1, 1]} : vector<9x128xf32> to vector<1x128xf32>
    %87 = vector.broadcast %86 : vector<1x128xf32> to vector<8x128xf32>
    %88 = arith.mulf %85, %87 : vector<8x128xf32>
    %89 = tpu.concatenate %57, %61, %65, %69, %72, %76, %80, %84, %88 in 0 : vector<8x128xf32>, vector<8x128xf32>, vector<8x128xf32>, vector<8x128xf32>, vector<8x128xf32>, vector<8x128xf32>, vector<8x128xf32>, vector<8x128xf32>, vector<8x128xf32> -> vector<72x128xf32>
    %cst_20 = arith.constant dense<0.000000e+00> : vector<8x128xf32>
    %90 = tpu.matmul %51, %89, %cst_20 {dimension_numbers = #tpu.dot_dimension_numbers<[1], [0], [0], [1], [0, 0, 1, 1], [], []>} : vector<8x72xf32>, vector<72x128xf32>, vector<8x128xf32> -> vector<8x128xf32>
    %91 = vector.broadcast %52 : vector<8x1xf32> to vector<8x128xf32>
    %92 = arith.addf %90, %91 : vector<8x128xf32>
    %cst_21 = arith.constant 0.000000e+00 : f32
    %93 = vector.broadcast %cst_21 : f32 to vector<8x128xf32>
    %94 = arith.maximumf %92, %93 : vector<8x128xf32>
    %c0_22 = arith.constant 0 : index
    %c0_23 = arith.constant 0 : index
    %95 = vector.load %arg8[%c0_22, %c0_23] : memref<128x128xf32, #tpu.memory_space<vmem>>, vector<128x128xf32>
    %c126_i32_24 = arith.constant 126 : i32
    %96 = tpu.dynamic_rotate %94 by %c126_i32_24 dim 1 : vector<8x128xf32>, i32 -> vector<8x128xf32>
    %97 = arith.maximumf %94, %96 : vector<8x128xf32>
    %c112_i32_25 = arith.constant 112 : i32
    %98 = tpu.dynamic_rotate %97 by %c112_i32_25 dim 1 : vector<8x128xf32>, i32 -> vector<8x128xf32>
    %99 = arith.maximumf %97, %98 : vector<8x128xf32>
    %cst_26 = arith.constant dense<0.000000e+00> : vector<8x128xf32>
    %100 = tpu.matmul %99, %95, %cst_26 {dimension_numbers = #tpu.dot_dimension_numbers<[1], [0], [0], [1], [0, 0, 1, 1], [], []>} : vector<8x128xf32>, vector<128x128xf32>, vector<8x128xf32> -> vector<8x128xf32>
    %c0_27 = arith.constant 0 : index
    %c0_28 = arith.constant 0 : index
    %101 = vector.load %arg9[%c0_27, %c0_28] : memref<8x72xf32, #tpu.memory_space<vmem>>, vector<8x72xf32>
    %c0_29 = arith.constant 0 : index
    %c0_30 = arith.constant 0 : index
    %102 = vector.load %arg10[%c0_29, %c0_30] : memref<8x1xf32, #tpu.memory_space<vmem>>, vector<8x1xf32>
    %c0_31 = arith.constant 0 : index
    %c0_32 = arith.constant 0 : index
    %103 = vector.load %arg11[%c0_31, %c0_32] : memref<9x128xf32, #tpu.memory_space<vmem>>, vector<9x128xf32>
    %c10_i32 = arith.constant 10 : i32
    %104 = tpu.dynamic_rotate %100 by %c10_i32 dim 1 : vector<8x128xf32>, i32 -> vector<8x128xf32>
    %105 = vector.extract_strided_slice %103 {offsets = [0, 0], sizes = [1, 128], strides = [1, 1]} : vector<9x128xf32> to vector<1x128xf32>
    %106 = vector.broadcast %105 : vector<1x128xf32> to vector<8x128xf32>
    %107 = arith.mulf %104, %106 : vector<8x128xf32>
    %c8_i32 = arith.constant 8 : i32
    %108 = tpu.dynamic_rotate %100 by %c8_i32 dim 1 : vector<8x128xf32>, i32 -> vector<8x128xf32>
    %109 = vector.extract_strided_slice %103 {offsets = [1, 0], sizes = [1, 128], strides = [1, 1]} : vector<9x128xf32> to vector<1x128xf32>
    %110 = vector.broadcast %109 : vector<1x128xf32> to vector<8x128xf32>
    %111 = arith.mulf %108, %110 : vector<8x128xf32>
    %c6_i32 = arith.constant 6 : i32
    %112 = tpu.dynamic_rotate %100 by %c6_i32 dim 1 : vector<8x128xf32>, i32 -> vector<8x128xf32>
    %113 = vector.extract_strided_slice %103 {offsets = [2, 0], sizes = [1, 128], strides = [1, 1]} : vector<9x128xf32> to vector<1x128xf32>
    %114 = vector.broadcast %113 : vector<1x128xf32> to vector<8x128xf32>
    %115 = arith.mulf %112, %114 : vector<8x128xf32>
    %c2_i32_33 = arith.constant 2 : i32
    %116 = tpu.dynamic_rotate %100 by %c2_i32_33 dim 1 : vector<8x128xf32>, i32 -> vector<8x128xf32>
    %117 = vector.extract_strided_slice %103 {offsets = [3, 0], sizes = [1, 128], strides = [1, 1]} : vector<9x128xf32> to vector<1x128xf32>
    %118 = vector.broadcast %117 : vector<1x128xf32> to vector<8x128xf32>
    %119 = arith.mulf %116, %118 : vector<8x128xf32>
    %120 = vector.extract_strided_slice %103 {offsets = [4, 0], sizes = [1, 128], strides = [1, 1]} : vector<9x128xf32> to vector<1x128xf32>
    %121 = vector.broadcast %120 : vector<1x128xf32> to vector<8x128xf32>
    %122 = arith.mulf %100, %121 : vector<8x128xf32>
    %c126_i32_34 = arith.constant 126 : i32
    %123 = tpu.dynamic_rotate %100 by %c126_i32_34 dim 1 : vector<8x128xf32>, i32 -> vector<8x128xf32>
    %124 = vector.extract_strided_slice %103 {offsets = [5, 0], sizes = [1, 128], strides = [1, 1]} : vector<9x128xf32> to vector<1x128xf32>
    %125 = vector.broadcast %124 : vector<1x128xf32> to vector<8x128xf32>
    %126 = arith.mulf %123, %125 : vector<8x128xf32>
    %c122_i32 = arith.constant 122 : i32
    %127 = tpu.dynamic_rotate %100 by %c122_i32 dim 1 : vector<8x128xf32>, i32 -> vector<8x128xf32>
    %128 = vector.extract_strided_slice %103 {offsets = [6, 0], sizes = [1, 128], strides = [1, 1]} : vector<9x128xf32> to vector<1x128xf32>
    %129 = vector.broadcast %128 : vector<1x128xf32> to vector<8x128xf32>
    %130 = arith.mulf %127, %129 : vector<8x128xf32>
    %c120_i32 = arith.constant 120 : i32
    %131 = tpu.dynamic_rotate %100 by %c120_i32 dim 1 : vector<8x128xf32>, i32 -> vector<8x128xf32>
    %132 = vector.extract_strided_slice %103 {offsets = [7, 0], sizes = [1, 128], strides = [1, 1]} : vector<9x128xf32> to vector<1x128xf32>
    %133 = vector.broadcast %132 : vector<1x128xf32> to vector<8x128xf32>
    %134 = arith.mulf %131, %133 : vector<8x128xf32>
    %c118_i32 = arith.constant 118 : i32
    %135 = tpu.dynamic_rotate %100 by %c118_i32 dim 1 : vector<8x128xf32>, i32 -> vector<8x128xf32>
    %136 = vector.extract_strided_slice %103 {offsets = [8, 0], sizes = [1, 128], strides = [1, 1]} : vector<9x128xf32> to vector<1x128xf32>
    %137 = vector.broadcast %136 : vector<1x128xf32> to vector<8x128xf32>
    %138 = arith.mulf %135, %137 : vector<8x128xf32>
    %139 = tpu.concatenate %107, %111, %115, %119, %122, %126, %130, %134, %138 in 0 : vector<8x128xf32>, vector<8x128xf32>, vector<8x128xf32>, vector<8x128xf32>, vector<8x128xf32>, vector<8x128xf32>, vector<8x128xf32>, vector<8x128xf32>, vector<8x128xf32> -> vector<72x128xf32>
    %cst_35 = arith.constant dense<0.000000e+00> : vector<8x128xf32>
    %140 = tpu.matmul %101, %139, %cst_35 {dimension_numbers = #tpu.dot_dimension_numbers<[1], [0], [0], [1], [0, 0, 1, 1], [], []>} : vector<8x72xf32>, vector<72x128xf32>, vector<8x128xf32> -> vector<8x128xf32>
    %141 = vector.broadcast %102 : vector<8x1xf32> to vector<8x128xf32>
    %142 = arith.addf %140, %141 : vector<8x128xf32>
    %cst_36 = arith.constant 0.000000e+00 : f32
    %143 = vector.broadcast %cst_36 : f32 to vector<8x128xf32>
    %144 = arith.maximumf %142, %143 : vector<8x128xf32>
    %c0_37 = arith.constant 0 : index
    %c0_38 = arith.constant 0 : index
    %145 = vector.load %arg12[%c0_37, %c0_38] : memref<128x128xf32, #tpu.memory_space<vmem>>, vector<128x128xf32>
    %c126_i32_39 = arith.constant 126 : i32
    %146 = tpu.dynamic_rotate %144 by %c126_i32_39 dim 1 : vector<8x128xf32>, i32 -> vector<8x128xf32>
    %147 = arith.maximumf %144, %146 : vector<8x128xf32>
    %c120_i32_40 = arith.constant 120 : i32
    %148 = tpu.dynamic_rotate %147 by %c120_i32_40 dim 1 : vector<8x128xf32>, i32 -> vector<8x128xf32>
    %149 = arith.maximumf %147, %148 : vector<8x128xf32>
    %cst_41 = arith.constant dense<0.000000e+00> : vector<8x128xf32>
    %150 = tpu.matmul %149, %145, %cst_41 {dimension_numbers = #tpu.dot_dimension_numbers<[1], [0], [0], [1], [0, 0, 1, 1], [], []>} : vector<8x128xf32>, vector<128x128xf32>, vector<8x128xf32> -> vector<8x128xf32>
    %c0_42 = arith.constant 0 : index
    %c0_43 = arith.constant 0 : index
    %151 = vector.load %arg13[%c0_42, %c0_43] : memref<10x32xf32, #tpu.memory_space<vmem>>, vector<10x32xf32>
    %c0_44 = arith.constant 0 : index
    %c0_45 = arith.constant 0 : index
    %152 = vector.load %arg14[%c0_44, %c0_45] : memref<10x1xf32, #tpu.memory_space<vmem>>, vector<10x1xf32>
    %153 = vector.extract_strided_slice %150 {offsets = [0, 0], sizes = [8, 2], strides = [1, 1]} : vector<8x128xf32> to vector<8x2xf32>
    %154 = vector.extract_strided_slice %150 {offsets = [0, 2], sizes = [8, 2], strides = [1, 1]} : vector<8x128xf32> to vector<8x2xf32>
    %155 = vector.extract_strided_slice %150 {offsets = [0, 4], sizes = [8, 2], strides = [1, 1]} : vector<8x128xf32> to vector<8x2xf32>
    %156 = vector.extract_strided_slice %150 {offsets = [0, 6], sizes = [8, 2], strides = [1, 1]} : vector<8x128xf32> to vector<8x2xf32>
    %157 = tpu.concatenate %153, %154, %155, %156 in 0 : vector<8x2xf32>, vector<8x2xf32>, vector<8x2xf32>, vector<8x2xf32> -> vector<32x2xf32>
    %cst_46 = arith.constant dense<0.000000e+00> : vector<10x2xf32>
    %158 = tpu.matmul %151, %157, %cst_46 {dimension_numbers = #tpu.dot_dimension_numbers<[1], [0], [0], [1], [0, 0, 1, 1], [], []>} : vector<10x32xf32>, vector<32x2xf32>, vector<10x2xf32> -> vector<10x2xf32>
    %159 = vector.broadcast %152 : vector<10x1xf32> to vector<10x2xf32>
    %160 = arith.addf %158, %159 : vector<10x2xf32>
    %c0_47 = arith.constant 0 : index
    %c0_48 = arith.constant 0 : index
    %161 = vector.load %arg15[%c0_47, %c0_48] : memref<10x2xf32, #tpu.memory_space<vmem>>, vector<10x2xf32>
    tpu.vector_store %arg15[%c0_47, %c0_48], %160 {strides = array<i32>} : memref<10x2xf32, #tpu.memory_space<vmem>>, vector<10x2xf32>,
    return
  }
}

</mosaic_0001>

<llo_original>
// kernel: fwd.1
$region0: #{fwd.1}
  #allocation0 [shape = 'u32[]', space=smem, size = 0x4, offset = 0x4, fixed_abs, tag = 'smem constant byte address 0x4 - core index']
  #allocation1 [shape = 'u32[144,128]{1,0:T(1,128)}', space=vmem, size = 0x12000, scoped, tag = 'internal scratch']
  %s0 = inlined_call_operand.vmem [shape: f32[8,512], index: 0, kind: input, shape index: {}]
  %s1 = inlined_call_operand.vmem [shape: f32[8,72], index: 1, kind: input, shape index: {}]
  %s2 = inlined_call_operand.vmem [shape: f32[8,1], index: 2, kind: input, shape index: {}, may-alias: {2,6,10}]
  %s3 = inlined_call_operand.vmem [shape: f32[9,512], index: 3, kind: input, shape index: {}]
  %s4 = inlined_call_operand.vmem [shape: f32[512,128], index: 4, kind: input, shape index: {}]
  %s5 = inlined_call_operand.vmem [shape: f32[8,72], index: 5, kind: input, shape index: {}]
  %s6 = inlined_call_operand.vmem [shape: f32[8,1], index: 6, kind: input, shape index: {}, may-alias: {2,6,10}]
  %s7 = inlined_call_operand.vmem [shape: f32[9,128], index: 7, kind: input, shape index: {}]
  %s8 = inlined_call_operand.vmem [shape: f32[128,128], index: 8, kind: input, shape index: {}]
  %s9 = inlined_call_operand.vmem [shape: f32[8,72], index: 9, kind: input, shape index: {}]
  %s10 = inlined_call_operand.vmem [shape: f32[8,1], index: 10, kind: input, shape index: {}, may-alias: {2,6,10}]
  %s11 = inlined_call_operand.vmem [shape: f32[9,128], index: 11, kind: input, shape index: {}]
  %s12 = inlined_call_operand.vmem [shape: f32[128,128], index: 12, kind: input, shape index: {}]
  %s13 = inlined_call_operand.vmem [shape: f32[10,32], index: 13, kind: input, shape index: {}]
  %s14 = inlined_call_operand.vmem [shape: f32[10,1], index: 14, kind: input, shape index: {}]
  %s15 = inlined_call_operand.vmem [shape: f32[10,2], index: 15, kind: output, shape index: {}]
  %s16 = sld [smem:[#allocation0]]
  $region70: #{fwd.1} parent=0
    _
  %s18 = ssub.s32 1, %s16
  %s19 = scalar_select 0, %s18, %s16
  // Predicated region
  $region2: #{fwd.1} parent=0 // pred_check
    _
  $region3: #{fwd.1} parent=0 // pred_check_branch
    %21 = sbr.rel (0) target = $region5
  $region4: #{fwd.1} parent=0 // pred_region
    _
  $region5: #{fwd.1} parent=0 // pred_fallthru
    _
  // Predicated region
  $region6: #{fwd.1} parent=0 // pred_check
    _
  $region7: #{fwd.1} parent=0 // pred_check_branch
    %23 = sbr.rel (0) target = $region9
  $region8: #{fwd.1} parent=0 // pred_region
    _
  $region9: #{fwd.1} parent=0 // pred_fallthru
    _
  // Predicated region
  $region10: #{fwd.1} parent=0 // pred_check
    _
  $region11: #{fwd.1} parent=0 // pred_check_branch
    %25 = sbr.rel (0) target = $region13
  $region12: #{fwd.1} parent=0 // pred_region
    _
  $region13: #{fwd.1} parent=0 // pred_fallthru
    _
  // Predicated region
  $region14: #{fwd.1} parent=0 // pred_check
    _
  $region15: #{fwd.1} parent=0 // pred_check_branch
    %27 = sbr.rel (0) target = $region17
  $region16: #{fwd.1} parent=0 // pred_region
    _
  $region17: #{fwd.1} parent=0 // pred_fallthru
    _
  // Predicated region
  $region18: #{fwd.1} parent=0 // pred_check
    _
  $region19: #{fwd.1} parent=0 // pred_check_branch
    %29 = sbr.rel (0) target = $region21
  $region20: #{fwd.1} parent=0 // pred_region
    _
  $region21: #{fwd.1} parent=0 // pred_fallthru
    _
  // Predicated region
  $region22: #{fwd.1} parent=0 // pred_check
    _
  $region23: #{fwd.1} parent=0 // pred_check_branch
    %31 = sbr.rel (0) target = $region25
  $region24: #{fwd.1} parent=0 // pred_region
    _
  $region25: #{fwd.1} parent=0 // pred_fallthru
    _
  // Predicated region
  $region26: #{fwd.1} parent=0 // pred_check
    _
  $region27: #{fwd.1} parent=0 // pred_check_branch
    %33 = sbr.rel (0) target = $region29
  $region28: #{fwd.1} parent=0 // pred_region
    _
  $region29: #{fwd.1} parent=0 // pred_fallthru
    _
  // Predicated region
  $region30: #{fwd.1} parent=0 // pred_check
    _
  $region31: #{fwd.1} parent=0 // pred_check_branch
    %35 = sbr.rel (0) target = $region33
  $region32: #{fwd.1} parent=0 // pred_region
    _
  $region33: #{fwd.1} parent=0 // pred_fallthru
    _
  // Predicated region
  $region34: #{fwd.1} parent=0 // pred_check
    _
  $region35: #{fwd.1} parent=0 // pred_check_branch
    %37 = sbr.rel (0) target = $region37
  $region36: #{fwd.1} parent=0 // pred_region
    _
  $region37: #{fwd.1} parent=0 // pred_fallthru
    _
  // Predicated region
  $region38: #{fwd.1} parent=0 // pred_check
    _
  $region39: #{fwd.1} parent=0 // pred_check_branch
    %39 = sbr.rel (0) target = $region41
  $region40: #{fwd.1} parent=0 // pred_region
    _
  $region41: #{fwd.1} parent=0 // pred_fallthru
    _
  // Predicated region
  $region42: #{fwd.1} parent=0 // pred_check
    _
  $region43: #{fwd.1} parent=0 // pred_check_branch
    %41 = sbr.rel (0) target = $region45
  $region44: #{fwd.1} parent=0 // pred_region
    _
  $region45: #{fwd.1} parent=0 // pred_fallthru
    _
  // Predicated region
  $region46: #{fwd.1} parent=0 // pred_check
    _
  $region47: #{fwd.1} parent=0 // pred_check_branch
    %43 = sbr.rel (0) target = $region49
  $region48: #{fwd.1} parent=0 // pred_region
    _
  $region49: #{fwd.1} parent=0 // pred_fallthru
    _
  // Predicated region
  $region50: #{fwd.1} parent=0 // pred_check
    _
  $region51: #{fwd.1} parent=0 // pred_check_branch
    %45 = sbr.rel (0) target = $region53
  $region52: #{fwd.1} parent=0 // pred_region
    _
  $region53: #{fwd.1} parent=0 // pred_fallthru
    _
  // Predicated region
  $region54: #{fwd.1} parent=0 // pred_check
    _
  $region55: #{fwd.1} parent=0 // pred_check_branch
    %47 = sbr.rel (0) target = $region57
  $region56: #{fwd.1} parent=0 // pred_region
    _
  $region57: #{fwd.1} parent=0 // pred_fallthru
    _
  // Predicated region
  $region58: #{fwd.1} parent=0 // pred_check
    _
  $region59: #{fwd.1} parent=0 // pred_check_branch
    %49 = sbr.rel (0) target = $region61
  $region60: #{fwd.1} parent=0 // pred_region
    _
  $region61: #{fwd.1} parent=0 // pred_fallthru
    _
  %v50 = vld [vmem:[%s0] sm:$0xff]
  %v51 = vld [vmem:[%s0 + $0x8] sm:$0xff]
  %v52 = vld [vmem:[%s0 + $0x10] sm:$0xff]
  %v53 = vld [vmem:[%s0 + $0x18] sm:$0xff]
  %v54 = vld [vmem:[%s1] sm:$0xff]
  %v55 = vld [vmem:[%s2] sm:$0xff]
  %v56 = vld [vmem:[%s3] sm:$0xff]
  %v57 = vld [vmem:[%s3 + $0x8] sm:$0xff]
  %v58 = vld [vmem:[%s3 + $0x10] sm:$0xff]
  %v59 = vld [vmem:[%s3 + $0x18] sm:$0xff]
  %v60 = vld [vmem:[%s3 + $0x20] sm:$0x1]
  %v61 = vld [vmem:[%s3 + $0x28] sm:$0x1]
  %v62 = vld [vmem:[%s3 + $0x30] sm:$0x1]
  %v63 = vld [vmem:[%s3 + $0x38] sm:$0x1]
  %64 = vrot.lane.b32.xlu0 %v50, 34
  %v65 = vpop.permute.xlu0 %64
  %66 = vrot.lane.b32.xlu0 %v51, 34
  %v67 = vpop.permute.xlu0 %66
  %68 = vrot.lane.b32.xlu0 %v52, 34
  %v69 = vpop.permute.xlu0 %68
  %70 = vrot.lane.b32.xlu0 %v53, 34
  %v71 = vpop.permute.xlu0 %70
  %v72 = vlaneseq
  %v73 = vand.u32 %v72, 127
  %vm74 = vcmp.lt.s32.totalorder %v73, 34
  %v75 = vsel %vm74, %v69, %v71
  %v76 = vsel %vm74, %v67, %v69
  %v77 = vsel %vm74, %v65, %v67
  %v78 = vsel %vm74, %v71, %v65
  %v79 = vlaneseq
  %v80 = vshrl.u32 %v79, 7
  %v81 = vsub.s32 0, %v80
  %v82 = vrot.slane %v56, %v81
  %v83 = vlaneseq
  %v84 = vshrl.u32 %v83, 7
  %v85 = vsub.s32 0, %v84
  %v86 = vrot.slane %v57, %v85
  %v87 = vlaneseq
  %v88 = vshrl.u32 %v87, 7
  %v89 = vsub.s32 0, %v88
  %v90 = vrot.slane %v58, %v89
  %v91 = vlaneseq
  %v92 = vshrl.u32 %v91, 7
  %v93 = vsub.s32 0, %v92
  %v94 = vrot.slane %v59, %v93
  %v95 = vmul.f32 %v78, %v82
  %v96 = vmul.f32 %v77, %v86
  %v97 = vmul.f32 %v76, %v90
  %v98 = vmul.f32 %v75, %v94
  %99 = vrot.lane.b32.xlu0 %v50, 32
  %v100 = vpop.permute.xlu0 %99
  %101 = vrot.lane.b32.xlu0 %v51, 32
  %v102 = vpop.permute.xlu0 %101
  %103 = vrot.lane.b32.xlu0 %v52, 32
  %v104 = vpop.permute.xlu0 %103
  %105 = vrot.lane.b32.xlu0 %v53, 32
  %v106 = vpop.permute.xlu0 %105
  %vm107 = vcmp.lt.s32.totalorder %v73, 32
  %v108 = vsel %vm107, %v104, %v106
  %v109 = vsel %vm107, %v102, %v104
  %v110 = vsel %vm107, %v100, %v102
  %v111 = vsel %vm107, %v106, %v100
  %v112 = vlaneseq
  %v113 = vshrl.u32 %v112, 7
  %v114 = vsub.s32 1, %v113
  %v115 = vrot.slane %v56, %v114
  %v116 = vlaneseq
  %v117 = vshrl.u32 %v116, 7
  %v118 = vsub.s32 1, %v117
  %v119 = vrot.slane %v57, %v118
  %v120 = vlaneseq
  %v121 = vshrl.u32 %v120, 7
  %v122 = vsub.s32 1, %v121
  %v123 = vrot.slane %v58, %v122
  %v124 = vlaneseq
  %v125 = vshrl.u32 %v124, 7
  %v126 = vsub.s32 1, %v125
  %v127 = vrot.slane %v59, %v126
  %v128 = vmul.f32 %v111, %v115
  %v129 = vmul.f32 %v110, %v119
  %v130 = vmul.f32 %v109, %v123
  %v131 = vmul.f32 %v108, %v127
  %132 = vrot.lane.b32.xlu0 %v50, 30
  %v133 = vpop.permute.xlu0 %132
  %134 = vrot.lane.b32.xlu0 %v51, 30
  %v135 = vpop.permute.xlu0 %134
  %136 = vrot.lane.b32.xlu0 %v52, 30
  %v137 = vpop.permute.xlu0 %136
  %138 = vrot.lane.b32.xlu0 %v53, 30
  %v139 = vpop.permute.xlu0 %138
  %vm140 = vcmp.lt.s32.totalorder %v73, 30
  %v141 = vsel %vm140, %v137, %v139
  %v142 = vsel %vm140, %v135, %v137
  %v143 = vsel %vm140, %v133, %v135
  %v144 = vsel %vm140, %v139, %v133
  %v145 = vlaneseq
  %v146 = vshrl.u32 %v145, 7
  %v147 = vsub.s32 2, %v146
  %v148 = vrot.slane %v56, %v147
  %v149 = vlaneseq
  %v150 = vshrl.u32 %v149, 7
  %v151 = vsub.s32 2, %v150
  %v152 = vrot.slane %v57, %v151
  %v153 = vlaneseq
  %v154 = vshrl.u32 %v153, 7
  %v155 = vsub.s32 2, %v154
  %v156 = vrot.slane %v58, %v155
  %v157 = vlaneseq
  %v158 = vshrl.u32 %v157, 7
  %v159 = vsub.s32 2, %v158
  %v160 = vrot.slane %v59, %v159
  %v161 = vmul.f32 %v144, %v148
  %v162 = vmul.f32 %v143, %v152
  %v163 = vmul.f32 %v142, %v156
  %v164 = vmul.f32 %v141, %v160
  %165 = vrot.lane.b32.xlu0 %v50, 2
  %v166 = vpop.permute.xlu0 %165
  %167 = vrot.lane.b32.xlu0 %v51, 2
  %v168 = vpop.permute.xlu0 %167
  %169 = vrot.lane.b32.xlu0 %v52, 2
  %v170 = vpop.permute.xlu0 %169
  %171 = vrot.lane.b32.xlu0 %v53, 2
  %v172 = vpop.permute.xlu0 %171
  %vm173 = vcmp.lt.s32.totalorder %v73, 2
  %v174 = vsel %vm173, %v170, %v172
  %v175 = vsel %vm173, %v168, %v170
  %v176 = vsel %vm173, %v166, %v168
  %v177 = vsel %vm173, %v172, %v166
  %v178 = vlaneseq
  %v179 = vshrl.u32 %v178, 7
  %v180 = vsub.s32 3, %v179
  %v181 = vrot.slane %v56, %v180
  %v182 = vlaneseq
  %v183 = vshrl.u32 %v182, 7
  %v184 = vsub.s32 3, %v183
  %v185 = vrot.slane %v57, %v184
  %v186 = vlaneseq
  %v187 = vshrl.u32 %v186, 7
  %v188 = vsub.s32 3, %v187
  %v189 = vrot.slane %v58, %v188
  %v190 = vlaneseq
  %v191 = vshrl.u32 %v190, 7
  %v192 = vsub.s32 3, %v191
  %v193 = vrot.slane %v59, %v192
  %v194 = vmul.f32 %v177, %v181
  %v195 = vmul.f32 %v176, %v185
  %v196 = vmul.f32 %v175, %v189
  %v197 = vmul.f32 %v174, %v193
  %v198 = vlaneseq
  %v199 = vshrl.u32 %v198, 7
  %v200 = vsub.s32 4, %v199
  %v201 = vrot.slane %v56, %v200
  %v202 = vlaneseq
  %v203 = vshrl.u32 %v202, 7
  %v204 = vsub.s32 4, %v203
  %v205 = vrot.slane %v57, %v204
  %v206 = vlaneseq
  %v207 = vshrl.u32 %v206, 7
  %v208 = vsub.s32 4, %v207
  %v209 = vrot.slane %v58, %v208
  %v210 = vlaneseq
  %v211 = vshrl.u32 %v210, 7
  %v212 = vsub.s32 4, %v211
  %v213 = vrot.slane %v59, %v212
  %v214 = vmul.f32 %v50, %v201
  %v215 = vmul.f32 %v51, %v205
  %v216 = vmul.f32 %v52, %v209
  %v217 = vmul.f32 %v53, %v213
  %218 = vrot.lane.b32.xlu0 %v50, 126
  %v219 = vpop.permute.xlu0 %218
  %220 = vrot.lane.b32.xlu0 %v51, 126
  %v221 = vpop.permute.xlu0 %220
  %222 = vrot.lane.b32.xlu0 %v52, 126
  %v223 = vpop.permute.xlu0 %222
  %224 = vrot.lane.b32.xlu0 %v53, 126
  %v225 = vpop.permute.xlu0 %224
  %vm226 = vcmp.lt.s32.totalorder %v73, 126
  %v227 = vsel %vm226, %v223, %v225
  %v228 = vsel %vm226, %v221, %v223
  %v229 = vsel %vm226, %v219, %v221
  %v230 = vsel %vm226, %v225, %v219
  %v231 = vlaneseq
  %v232 = vshrl.u32 %v231, 7
  %v233 = vsub.s32 5, %v232
  %v234 = vrot.slane %v56, %v233
  %v235 = vlaneseq
  %v236 = vshrl.u32 %v235, 7
  %v237 = vsub.s32 5, %v236
  %v238 = vrot.slane %v57, %v237
  %v239 = vlaneseq
  %v240 = vshrl.u32 %v239, 7
  %v241 = vsub.s32 5, %v240
  %v242 = vrot.slane %v58, %v241
  %v243 = vlaneseq
  %v244 = vshrl.u32 %v243, 7
  %v245 = vsub.s32 5, %v244
  %v246 = vrot.slane %v59, %v245
  %v247 = vmul.f32 %v229, %v234
  %v248 = vmul.f32 %v228, %v238
  %v249 = vmul.f32 %v227, %v242
  %v250 = vmul.f32 %v230, %v246
  %251 = vrot.lane.b32.xlu0 %v50, 98
  %v252 = vpop.permute.xlu0 %251
  %253 = vrot.lane.b32.xlu0 %v51, 98
  %v254 = vpop.permute.xlu0 %253
  %255 = vrot.lane.b32.xlu0 %v52, 98
  %v256 = vpop.permute.xlu0 %255
  %257 = vrot.lane.b32.xlu0 %v53, 98
  %v258 = vpop.permute.xlu0 %257
  %vm259 = vcmp.lt.s32.totalorder %v73, 98
  %v260 = vsel %vm259, %v256, %v258
  %v261 = vsel %vm259, %v254, %v256
  %v262 = vsel %vm259, %v252, %v254
  %v263 = vsel %vm259, %v258, %v252
  %v264 = vlaneseq
  %v265 = vshrl.u32 %v264, 7
  %v266 = vsub.s32 6, %v265
  %v267 = vrot.slane %v56, %v266
  %v268 = vlaneseq
  %v269 = vshrl.u32 %v268, 7
  %v270 = vsub.s32 6, %v269
  %v271 = vrot.slane %v57, %v270
  %v272 = vlaneseq
  %v273 = vshrl.u32 %v272, 7
  %v274 = vsub.s32 6, %v273
  %v275 = vrot.slane %v58, %v274
  %v276 = vlaneseq
  %v277 = vshrl.u32 %v276, 7
  %v278 = vsub.s32 6, %v277
  %v279 = vrot.slane %v59, %v278
  %v280 = vmul.f32 %v262, %v267
  %v281 = vmul.f32 %v261, %v271
  %v282 = vmul.f32 %v260, %v275
  %v283 = vmul.f32 %v263, %v279
  %284 = vrot.lane.b32.xlu0 %v50, 96
  %v285 = vpop.permute.xlu0 %284
  %286 = vrot.lane.b32.xlu0 %v51, 96
  %v287 = vpop.permute.xlu0 %286
  %288 = vrot.lane.b32.xlu0 %v52, 96
  %v289 = vpop.permute.xlu0 %288
  %290 = vrot.lane.b32.xlu0 %v53, 96
  %v291 = vpop.permute.xlu0 %290
  %vm292 = vcmp.lt.s32.totalorder %v73, 96
  %v293 = vsel %vm292, %v289, %v291
  %v294 = vsel %vm292, %v287, %v289
  %v295 = vsel %vm292, %v285, %v287
  %v296 = vsel %vm292, %v291, %v285
  %v297 = vlaneseq
  %v298 = vshrl.u32 %v297, 7
  %v299 = vsub.s32 7, %v298
  %v300 = vrot.slane %v56, %v299
  %v301 = vlaneseq
  %v302 = vshrl.u32 %v301, 7
  %v303 = vsub.s32 7, %v302
  %v304 = vrot.slane %v57, %v303
  %v305 = vlaneseq
  %v306 = vshrl.u32 %v305, 7
  %v307 = vsub.s32 7, %v306
  %v308 = vrot.slane %v58, %v307
  %v309 = vlaneseq
  %v310 = vshrl.u32 %v309, 7
  %v311 = vsub.s32 7, %v310
  %v312 = vrot.slane %v59, %v311
  %v313 = vmul.f32 %v295, %v300
  %v314 = vmul.f32 %v294, %v304
  %v315 = vmul.f32 %v293, %v308
  %v316 = vmul.f32 %v296, %v312
  %317 = vrot.lane.b32.xlu0 %v50, 94
  %v318 = vpop.permute.xlu0 %317
  %319 = vrot.lane.b32.xlu0 %v51, 94
  %v320 = vpop.permute.xlu0 %319
  %321 = vrot.lane.b32.xlu0 %v52, 94
  %v322 = vpop.permute.xlu0 %321
  %323 = vrot.lane.b32.xlu0 %v53, 94
  %v324 = vpop.permute.xlu0 %323
  %vm325 = vcmp.lt.s32.totalorder %v73, 94
  %v326 = vsel %vm325, %v322, %v324
  %v327 = vsel %vm325, %v320, %v322
  %v328 = vsel %vm325, %v318, %v320
  %v329 = vsel %vm325, %v324, %v318
  %v330 = vlaneseq
  %v331 = vshrl.u32 %v330, 7
  %v332 = vsub.s32 0, %v331
  %v333 = vrot.slane %v60, %v332
  %v334 = vlaneseq
  %v335 = vshrl.u32 %v334, 7
  %v336 = vsub.s32 0, %v335
  %v337 = vrot.slane %v61, %v336
  %v338 = vlaneseq
  %v339 = vshrl.u32 %v338, 7
  %v340 = vsub.s32 0, %v339
  %v341 = vrot.slane %v62, %v340
  %v342 = vlaneseq
  %v343 = vshrl.u32 %v342, 7
  %v344 = vsub.s32 0, %v343
  %v345 = vrot.slane %v63, %v344
  %v346 = vmul.f32 %v328, %v333
  %v347 = vmul.f32 %v327, %v337
  %v348 = vmul.f32 %v326, %v341
  %v349 = vmul.f32 %v329, %v345
  %351 = vset.pattern.permute.xlu0 0
  %352 = vperm.xlu0 %351, %v55
  %v353 = vpop.permute.xlu0 %352
  %vm355 = vcmask 588800
  %v357 = vsel %vm355, %v54, 0
  %359 = vmatprep.subr.mxu0 %v96
  %360 = vmatpush1.msra.mxu0 %v95
  %361 = vmatprep.subr.mxu0 %v129
  %362 = vmatpush1.msra.mxu0 %v128
  %363 = vmatprep.subr.mxu0 %v162
  %364 = vmatpush1.msra.mxu0 %v161
  %365 = vmatprep.subr.mxu0 %v195
  %366 = vmatpush1.msra.mxu0 %v194
  %367 = vmatprep.subr.mxu0 %v215
  %368 = vmatpush1.msra.mxu0 %v214
  %369 = vmatprep.subr.mxu0 %v248
  %370 = vmatpush1.msra.mxu0 %v247
  %371 = vmatprep.subr.mxu0 %v281
  %372 = vmatpush1.msra.mxu0 %v280
  %373 = vmatprep.subr.mxu0 %v314
  %374 = vmatpush1.msra.mxu0 %v313
  %375 = vmatprep.subr.mxu0 %v347
  %376 = vmatpush1.msra.mxu0 %v346
  %377 = vmatprep.subr.mxu0 0.0
  %378 = vmatpush1.msra.mxu0 0.0
  %379 = vmatprep.subr.mxu0 0.0
  %380 = vmatpush1.msra.mxu0 0.0
  %381 = vmatprep.subr.mxu0 0.0
  %382 = vmatpush1.msra.mxu0 0.0
  %383 = vmatprep.subr.mxu0 0.0
  %384 = vmatpush1.msra.mxu0 0.0
  %385 = vmatprep.subr.mxu0 0.0
  %386 = vmatpush1.msra.mxu0 0.0
  %387 = vmatprep.subr.mxu0 0.0
  %388 = vmatpush1.msra.mxu0 0.0
  %389 = vmatprep.subr.mxu0 0.0
  %390 = vmatpush1.msra.mxu0 0.0
  %391 = vmatprep.subr.mxu0 0.0
  %392 = vmatpush1.msra.mxu0 0.0
  %393 = vmatprep.subr.mxu0 0.0
  %394 = vmatpush1.msra.mxu0 0.0
  %395 = vmatprep.subr.mxu0 0.0
  %396 = vmatpush1.msra.mxu0 0.0
  %397 = vmatprep.subr.mxu0 0.0
  %398 = vmatpush1.msra.mxu0 0.0
  %399 = vmatprep.subr.mxu0 0.0
  %400 = vmatpush1.msra.mxu0 0.0
  %401 = vmatprep.subr.mxu0 0.0
  %402 = vmatpush1.msra.mxu0 0.0
  %403 = vmatprep.subr.mxu0 0.0
  %404 = vmatpush1.msra.mxu0 0.0
  %405 = vmatprep.subr.mxu0 0.0
  %406 = vmatpush1.msra.mxu0 0.0
  %407 = vmatprep.subr.mxu0 0.0
  %408 = vmatpush1.msra.mxu0 0.0
  %409 = vmatprep.subr.mxu0 0.0
  %410 = vmatpush1.msra.mxu0 0.0
  %411 = vmatprep.subr.mxu0 0.0
  %412 = vmatpush1.msra.mxu0 0.0
  %413 = vmatprep.subr.mxu0 0.0
  %414 = vmatpush1.msra.mxu0 0.0
  %415 = vmatprep.subr.mxu0 0.0
  %416 = vmatpush1.msra.mxu0 0.0
  %417 = vmatprep.subr.mxu0 0.0
  %418 = vmatpush1.msra.mxu0 0.0
  %419 = vmatprep.subr.mxu0 0.0
  %420 = vmatpush1.msra.mxu0 0.0
  %421 = vmatprep.subr.mxu0 0.0
  %422 = vmatpush1.msra.mxu0 0.0
  %423 = vmatprep.mubr.f32.mxu0 0.0
  %424 = vmatmul.mubr.f32.gmra.mrb[0].mxu0 %v357
  %v425 = vpop.f32.mrb[0].mxu0
  %v426 = vadd.f32 %v353, %v425
  %v427 = vpop.f32.mrb[0].mxu0
  %v428 = vadd.f32 %v353, %v427
  %429 = vdwg.mxu0
  %430 = vmatprep.subr.mxu0 %v98
  %431 = vmatpush1.msra.mxu0 %v97
  %432 = vmatprep.subr.mxu0 %v131
  %433 = vmatpush1.msra.mxu0 %v130
  %434 = vmatprep.subr.mxu0 %v164
  %435 = vmatpush1.msra.mxu0 %v163
  %436 = vmatprep.subr.mxu0 %v197
  %437 = vmatpush1.msra.mxu0 %v196
  %438 = vmatprep.subr.mxu0 %v217
  %439 = vmatpush1.msra.mxu0 %v216
  %440 = vmatprep.subr.mxu0 %v250
  %441 = vmatpush1.msra.mxu0 %v249
  %442 = vmatprep.subr.mxu0 %v283
  %443 = vmatpush1.msra.mxu0 %v282
  %444 = vmatprep.subr.mxu0 %v316
  %445 = vmatpush1.msra.mxu0 %v315
  %446 = vmatprep.subr.mxu0 %v349
  %447 = vmatpush1.msra.mxu0 %v348
  %448 = vmatprep.subr.mxu0 0.0
  %449 = vmatpush1.msra.mxu0 0.0
  %450 = vmatprep.subr.mxu0 0.0
  %451 = vmatpush1.msra.mxu0 0.0
  %452 = vmatprep.subr.mxu0 0.0
  %453 = vmatpush1.msra.mxu0 0.0
  %454 = vmatprep.subr.mxu0 0.0
  %455 = vmatpush1.msra.mxu0 0.0
  %456 = vmatprep.subr.mxu0 0.0
  %457 = vmatpush1.msra.mxu0 0.0
  %458 = vmatprep.subr.mxu0 0.0
  %459 = vmatpush1.msra.mxu0 0.0
  %460 = vmatprep.subr.mxu0 0.0
  %461 = vmatpush1.msra.mxu0 0.0
  %462 = vmatprep.subr.mxu0 0.0
  %463 = vmatpush1.msra.mxu0 0.0
  %464 = vmatprep.subr.mxu0 0.0
  %465 = vmatpush1.msra.mxu0 0.0
  %466 = vmatprep.subr.mxu0 0.0
  %467 = vmatpush1.msra.mxu0 0.0
  %468 = vmatprep.subr.mxu0 0.0
  %469 = vmatpush1.msra.mxu0 0.0
  %470 = vmatprep.subr.mxu0 0.0
  %471 = vmatpush1.msra.mxu0 0.0
  %472 = vmatprep.subr.mxu0 0.0
  %473 = vmatpush1.msra.mxu0 0.0
  %474 = vmatprep.subr.mxu0 0.0
  %475 = vmatpush1.msra.mxu0 0.0
  %476 = vmatprep.subr.mxu0 0.0
  %477 = vmatpush1.msra.mxu0 0.0
  %478 = vmatprep.subr.mxu0 0.0
  %479 = vmatpush1.msra.mxu0 0.0
  %480 = vmatprep.subr.mxu0 0.0
  %481 = vmatpush1.msra.mxu0 0.0
  %482 = vmatprep.subr.mxu0 0.0
  %483 = vmatpush1.msra.mxu0 0.0
  %484 = vmatprep.subr.mxu0 0.0
  %485 = vmatpush1.msra.mxu0 0.0
  %486 = vmatprep.subr.mxu0 0.0
  %487 = vmatpush1.msra.mxu0 0.0
  %488 = vmatprep.subr.mxu0 0.0
  %489 = vmatpush1.msra.mxu0 0.0
  %490 = vmatprep.subr.mxu0 0.0
  %491 = vmatpush1.msra.mxu0 0.0
  %492 = vmatprep.subr.mxu0 0.0
  %493 = vmatpush1.msra.mxu0 0.0
  %494 = vmatprep.mubr.f32.mxu0 0.0
  %495 = vmatmul.mubr.f32.gmra.mrb[0].mxu0 %v357
  %v496 = vpop.f32.mrb[0].mxu0
  %v497 = vadd.f32 %v353, %v496
  %v498 = vpop.f32.mrb[0].mxu0
  %v499 = vadd.f32 %v353, %v498
  %500 = vdwg.mxu0
  %v501 = vmax.f32 %v426, 0.0
  %v502 = vmax.f32 %v428, 0.0
  %v503 = vmax.f32 %v497, 0.0
  %v504 = vmax.f32 %v499, 0.0
  %v505 = vld [vmem:[%s4] sm:$0xff]
  %v506 = vld [vmem:[%s4 + $0x8] sm:$0xff]
  %v507 = vld [vmem:[%s4 + $0x10] sm:$0xff]
  %v508 = vld [vmem:[%s4 + $0x18] sm:$0xff]
  %v509 = vld [vmem:[%s4 + $0x20] sm:$0xff]
  %v510 = vld [vmem:[%s4 + $0x28] sm:$0xff]
  %v511 = vld [vmem:[%s4 + $0x30] sm:$0xff]
  %v512 = vld [vmem:[%s4 + $0x38] sm:$0xff]
  %v513 = vld [vmem:[%s4 + $0x40] sm:$0xff]
  %v514 = vld [vmem:[%s4 + $0x48] sm:$0xff]
  %v515 = vld [vmem:[%s4 + $0x50] sm:$0xff]
  %v516 = vld [vmem:[%s4 + $0x58] sm:$0xff]
  %v517 = vld [vmem:[%s4 + $0x60] sm:$0xff]
  %v518 = vld [vmem:[%s4 + $0x68] sm:$0xff]
  %v519 = vld [vmem:[%s4 + $0x70] sm:$0xff]
  %v520 = vld [vmem:[%s4 + $0x78] sm:$0xff]
  %v521 = vld [vmem:[%s4 + $0x80] sm:$0xff]
  %v522 = vld [vmem:[%s4 + $0x88] sm:$0xff]
  %v523 = vld [vmem:[%s4 + $0x90] sm:$0xff]
  %v524 = vld [vmem:[%s4 + $0x98] sm:$0xff]
  %v525 = vld [vmem:[%s4 + $0xa0] sm:$0xff]
  %v526 = vld [vmem:[%s4 + $0xa8] sm:$0xff]
  %v527 = vld [vmem:[%s4 + $0xb0] sm:$0xff]
  %v528 = vld [vmem:[%s4 + $0xb8] sm:$0xff]
  %v529 = vld [vmem:[%s4 + $0xc0] sm:$0xff]
  %v530 = vld [vmem:[%s4 + $0xc8] sm:$0xff]
  %v531 = vld [vmem:[%s4 + $0xd0] sm:$0xff]
  %v532 = vld [vmem:[%s4 + $0xd8] sm:$0xff]
  %v533 = vld [vmem:[%s4 + $0xe0] sm:$0xff]
  %v534 = vld [vmem:[%s4 + $0xe8] sm:$0xff]
  %v535 = vld [vmem:[%s4 + $0xf0] sm:$0xff]
  %v536 = vld [vmem:[%s4 + $0xf8] sm:$0xff]
  %v537 = vld [vmem:[%s4 + $0x100] sm:$0xff]
  %v538 = vld [vmem:[%s4 + $0x108] sm:$0xff]
  %v539 = vld [vmem:[%s4 + $0x110] sm:$0xff]
  %v540 = vld [vmem:[%s4 + $0x118] sm:$0xff]
  %v541 = vld [vmem:[%s4 + $0x120] sm:$0xff]
  %v542 = vld [vmem:[%s4 + $0x128] sm:$0xff]
  %v543 = vld [vmem:[%s4 + $0x130] sm:$0xff]
  %v544 = vld [vmem:[%s4 + $0x138] sm:$0xff]
  %v545 = vld [vmem:[%s4 + $0x140] sm:$0xff]
  %v546 = vld [vmem:[%s4 + $0x148] sm:$0xff]
  %v547 = vld [vmem:[%s4 + $0x150] sm:$0xff]
  %v548 = vld [vmem:[%s4 + $0x158] sm:$0xff]
  %v549 = vld [vmem:[%s4 + $0x160] sm:$0xff]
  %v550 = vld [vmem:[%s4 + $0x168] sm:$0xff]
  %v551 = vld [vmem:[%s4 + $0x170] sm:$0xff]
  %v552 = vld [vmem:[%s4 + $0x178] sm:$0xff]
  %v553 = vld [vmem:[%s4 + $0x180] sm:$0xff]
  %v554 = vld [vmem:[%s4 + $0x188] sm:$0xff]
  %v555 = vld [vmem:[%s4 + $0x190] sm:$0xff]
  %v556 = vld [vmem:[%s4 + $0x198] sm:$0xff]
  %v557 = vld [vmem:[%s4 + $0x1a0] sm:$0xff]
  %v558 = vld [vmem:[%s4 + $0x1a8] sm:$0xff]
  %v559 = vld [vmem:[%s4 + $0x1b0] sm:$0xff]
  %v560 = vld [vmem:[%s4 + $0x1b8] sm:$0xff]
  %v561 = vld [vmem:[%s4 + $0x1c0] sm:$0xff]
  %v562 = vld [vmem:[%s4 + $0x1c8] sm:$0xff]
  %v563 = vld [vmem:[%s4 + $0x1d0] sm:$0xff]
  %v564 = vld [vmem:[%s4 + $0x1d8] sm:$0xff]
  %v565 = vld [vmem:[%s4 + $0x1e0] sm:$0xff]
  %v566 = vld [vmem:[%s4 + $0x1e8] sm:$0xff]
  %v567 = vld [vmem:[%s4 + $0x1f0] sm:$0xff]
  %v568 = vld [vmem:[%s4 + $0x1f8] sm:$0xff]
  %569 = vrot.lane.b32.xlu0 %v501, 126
  %v570 = vpop.permute.xlu0 %569
  %571 = vrot.lane.b32.xlu0 %v502, 126
  %v572 = vpop.permute.xlu0 %571
  %573 = vrot.lane.b32.xlu0 %v503, 126
  %v574 = vpop.permute.xlu0 %573
  %575 = vrot.lane.b32.xlu0 %v504, 126
  %v576 = vpop.permute.xlu0 %575
  %v577 = vsel %vm226, %v574, %v576
  %v578 = vsel %vm226, %v572, %v574
  %v579 = vsel %vm226, %v570, %v572
  %v580 = vsel %vm226, %v576, %v570
  %v581 = vmax.f32 %v501, %v579
  %v582 = vmax.f32 %v502, %v578
  %v583 = vmax.f32 %v503, %v577
  %v584 = vmax.f32 %v504, %v580
  %585 = vrot.lane.b32.xlu0 %v581, 96
  %v586 = vpop.permute.xlu0 %585
  %587 = vrot.lane.b32.xlu0 %v582, 96
  %v588 = vpop.permute.xlu0 %587
  %589 = vrot.lane.b32.xlu0 %v583, 96
  %v590 = vpop.permute.xlu0 %589
  %591 = vrot.lane.b32.xlu0 %v584, 96
  %v592 = vpop.permute.xlu0 %591
  %v593 = vsel %vm292, %v590, %v592
  %v594 = vsel %vm292, %v588, %v590
  %v595 = vsel %vm292, %v586, %v588
  %v596 = vsel %vm292, %v592, %v586
  %v597 = vmax.f32 %v581, %v595
  %v598 = vmax.f32 %v582, %v594
  %v599 = vmax.f32 %v583, %v593
  %v600 = vmax.f32 %v584, %v596
  %601 = vmatprep.subr.mxu0 0.0
  %602 = vmatpush1.msra.mxu0 %v505
  %603 = vmatprep.subr.mxu0 0.0
  %604 = vmatpush1.msra.mxu0 %v506
  %605 = vmatprep.subr.mxu0 0.0
  %606 = vmatpush1.msra.mxu0 %v507
  %607 = vmatprep.subr.mxu0 0.0
  %608 = vmatpush1.msra.mxu0 %v508
  %609 = vmatprep.subr.mxu0 0.0
  %610 = vmatpush1.msra.mxu0 %v509
  %611 = vmatprep.subr.mxu0 0.0
  %612 = vmatpush1.msra.mxu0 %v510
  %613 = vmatprep.subr.mxu0 0.0
  %614 = vmatpush1.msra.mxu0 %v511
  %615 = vmatprep.subr.mxu0 0.0
  %616 = vmatpush1.msra.mxu0 %v512
  %617 = vmatprep.subr.mxu0 0.0
  %618 = vmatpush1.msra.mxu0 %v513
  %619 = vmatprep.subr.mxu0 0.0
  %620 = vmatpush1.msra.mxu0 %v514
  %621 = vmatprep.subr.mxu0 0.0
  %622 = vmatpush1.msra.mxu0 %v515
  %623 = vmatprep.subr.mxu0 0.0
  %624 = vmatpush1.msra.mxu0 %v516
  %625 = vmatprep.subr.mxu0 0.0
  %626 = vmatpush1.msra.mxu0 %v517
  %627 = vmatprep.subr.mxu0 0.0
  %628 = vmatpush1.msra.mxu0 %v518
  %629 = vmatprep.subr.mxu0 0.0
  %630 = vmatpush1.msra.mxu0 %v519
  %631 = vmatprep.subr.mxu0 0.0
  %632 = vmatpush1.msra.mxu0 %v520
  %633 = vmatprep.subr.mxu0 0.0
  %634 = vmatpush1.msra.mxu0 %v521
  %635 = vmatprep.subr.mxu0 0.0
  %636 = vmatpush1.msra.mxu0 %v522
  %637 = vmatprep.subr.mxu0 0.0
  %638 = vmatpush1.msra.mxu0 %v523
  %639 = vmatprep.subr.mxu0 0.0
  %640 = vmatpush1.msra.mxu0 %v524
  %641 = vmatprep.subr.mxu0 0.0
  %642 = vmatpush1.msra.mxu0 %v525
  %643 = vmatprep.subr.mxu0 0.0
  %644 = vmatpush1.msra.mxu0 %v526
  %645 = vmatprep.subr.mxu0 0.0
  %646 = vmatpush1.msra.mxu0 %v527
  %647 = vmatprep.subr.mxu0 0.0
  %648 = vmatpush1.msra.mxu0 %v528
  %649 = vmatprep.subr.mxu0 0.0
  %650 = vmatpush1.msra.mxu0 %v529
  %651 = vmatprep.subr.mxu0 0.0
  %652 = vmatpush1.msra.mxu0 %v530
  %653 = vmatprep.subr.mxu0 0.0
  %654 = vmatpush1.msra.mxu0 %v531
  %655 = vmatprep.subr.mxu0 0.0
  %656 = vmatpush1.msra.mxu0 %v532
  %657 = vmatprep.subr.mxu0 0.0
  %658 = vmatpush1.msra.mxu0 %v533
  %659 = vmatprep.subr.mxu0 0.0
  %660 = vmatpush1.msra.mxu0 %v534
  %661 = vmatprep.subr.mxu0 0.0
  %662 = vmatpush1.msra.mxu0 %v535
  %663 = vmatprep.subr.mxu0 0.0
  %664 = vmatpush1.msra.mxu0 %v536
  %665 = vmatprep.mubr.f32.mxu0 %v598
  %666 = vmatmul.mubr.f32.gmra.mrb[0].mxu0 %v597
  %v667 = vpop.f32.mrb[0].mxu0
  %v668 = vadd.f32 0.0, %v667
  %v669 = vpop.f32.mrb[0].mxu0
  %670 = vdwg.mxu0
  %671 = vmatprep.subr.mxu0 0.0
  %672 = vmatpush1.msra.mxu0 %v537
  %673 = vmatprep.subr.mxu0 0.0
  %674 = vmatpush1.msra.mxu0 %v538
  %675 = vmatprep.subr.mxu0 0.0
  %676 = vmatpush1.msra.mxu0 %v539
  %677 = vmatprep.subr.mxu0 0.0
  %678 = vmatpush1.msra.mxu0 %v540
  %679 = vmatprep.subr.mxu0 0.0
  %680 = vmatpush1.msra.mxu0 %v541
  %681 = vmatprep.subr.mxu0 0.0
  %682 = vmatpush1.msra.mxu0 %v542
  %683 = vmatprep.subr.mxu0 0.0
  %684 = vmatpush1.msra.mxu0 %v543
  %685 = vmatprep.subr.mxu0 0.0
  %686 = vmatpush1.msra.mxu0 %v544
  %687 = vmatprep.subr.mxu0 0.0
  %688 = vmatpush1.msra.mxu0 %v545
  %689 = vmatprep.subr.mxu0 0.0
  %690 = vmatpush1.msra.mxu0 %v546
  %691 = vmatprep.subr.mxu0 0.0
  %692 = vmatpush1.msra.mxu0 %v547
  %693 = vmatprep.subr.mxu0 0.0
  %694 = vmatpush1.msra.mxu0 %v548
  %695 = vmatprep.subr.mxu0 0.0
  %696 = vmatpush1.msra.mxu0 %v549
  %697 = vmatprep.subr.mxu0 0.0
  %698 = vmatpush1.msra.mxu0 %v550
  %699 = vmatprep.subr.mxu0 0.0
  %700 = vmatpush1.msra.mxu0 %v551
  %701 = vmatprep.subr.mxu0 0.0
  %702 = vmatpush1.msra.mxu0 %v552
  %703 = vmatprep.subr.mxu0 0.0
  %704 = vmatpush1.msra.mxu0 %v553
  %705 = vmatprep.subr.mxu0 0.0
  %706 = vmatpush1.msra.mxu0 %v554
  %707 = vmatprep.subr.mxu0 0.0
  %708 = vmatpush1.msra.mxu0 %v555
  %709 = vmatprep.subr.mxu0 0.0
  %710 = vmatpush1.msra.mxu0 %v556
  %711 = vmatprep.subr.mxu0 0.0
  %712 = vmatpush1.msra.mxu0 %v557
  %713 = vmatprep.subr.mxu0 0.0
  %714 = vmatpush1.msra.mxu0 %v558
  %715 = vmatprep.subr.mxu0 0.0
  %716 = vmatpush1.msra.mxu0 %v559
  %717 = vmatprep.subr.mxu0 0.0
  %718 = vmatpush1.msra.mxu0 %v560
  %719 = vmatprep.subr.mxu0 0.0
  %720 = vmatpush1.msra.mxu0 %v561
  %721 = vmatprep.subr.mxu0 0.0
  %722 = vmatpush1.msra.mxu0 %v562
  %723 = vmatprep.subr.mxu0 0.0
  %724 = vmatpush1.msra.mxu0 %v563
  %725 = vmatprep.subr.mxu0 0.0
  %726 = vmatpush1.msra.mxu0 %v564
  %727 = vmatprep.subr.mxu0 0.0
  %728 = vmatpush1.msra.mxu0 %v565
  %729 = vmatprep.subr.mxu0 0.0
  %730 = vmatpush1.msra.mxu0 %v566
  %731 = vmatprep.subr.mxu0 0.0
  %732 = vmatpush1.msra.mxu0 %v567
  %733 = vmatprep.subr.mxu0 0.0
  %734 = vmatpush1.msra.mxu0 %v568
  %735 = vmatprep.mubr.f32.mxu0 %v600
  %736 = vmatmul.mubr.f32.gmra.mrb[0].mxu0 %v599
  %v737 = vpop.f32.mrb[0].mxu0
  %v738 = vadd.f32 %v668, %v737
  %v739 = vpop.f32.mrb[0].mxu0
  %740 = vdwg.mxu0
  %v741 = vld [vmem:[%s5] sm:$0xff]
  %v742 = vld [vmem:[%s6] sm:$0xff]
  %v743 = vld [vmem:[%s7] sm:$0xff]
  %v744 = vld [vmem:[%s7 + $0x8] sm:$0x1]
  %745 = vrot.lane.b32.xlu0 %v738, 18
  %v746 = vpop.permute.xlu0 %745
  %v747 = vlaneseq
  %v748 = vshrl.u32 %v747, 7
  %v749 = vsub.s32 0, %v748
  %v750 = vrot.slane %v743, %v749
  %v751 = vmul.f32 %v746, %v750
  %752 = vrot.lane.b32.xlu0 %v738, 16
  %v753 = vpop.permute.xlu0 %752
  %v754 = vlaneseq
  %v755 = vshrl.u32 %v754, 7
  %v756 = vsub.s32 1, %v755
  %v757 = vrot.slane %v743, %v756
  %v758 = vmul.f32 %v753, %v757
  %759 = vrot.lane.b32.xlu0 %v738, 14
  %v760 = vpop.permute.xlu0 %759
  %v761 = vlaneseq
  %v762 = vshrl.u32 %v761, 7
  %v763 = vsub.s32 2, %v762
  %v764 = vrot.slane %v743, %v763
  %v765 = vmul.f32 %v760, %v764
  %766 = vrot.lane.b32.xlu0 %v738, 2
  %v767 = vpop.permute.xlu0 %766
  %v768 = vlaneseq
  %v769 = vshrl.u32 %v768, 7
  %v770 = vsub.s32 3, %v769
  %v771 = vrot.slane %v743, %v770
  %v772 = vmul.f32 %v767, %v771
  %v773 = vlaneseq
  %v774 = vshrl.u32 %v773, 7
  %v775 = vsub.s32 4, %v774
  %v776 = vrot.slane %v743, %v775
  %v777 = vmul.f32 %v738, %v776
  %778 = vrot.lane.b32.xlu0 %v738, 126
  %v779 = vpop.permute.xlu0 %778
  %v780 = vlaneseq
  %v781 = vshrl.u32 %v780, 7
  %v782 = vsub.s32 5, %v781
  %v783 = vrot.slane %v743, %v782
  %v784 = vmul.f32 %v779, %v783
  %785 = vrot.lane.b32.xlu0 %v738, 114
  %v786 = vpop.permute.xlu0 %785
  %v787 = vlaneseq
  %v788 = vshrl.u32 %v787, 7
  %v789 = vsub.s32 6, %v788
  %v790 = vrot.slane %v743, %v789
  %v791 = vmul.f32 %v786, %v790
  %792 = vrot.lane.b32.xlu0 %v738, 112
  %v793 = vpop.permute.xlu0 %792
  %v794 = vlaneseq
  %v795 = vshrl.u32 %v794, 7
  %v796 = vsub.s32 7, %v795
  %v797 = vrot.slane %v743, %v796
  %v798 = vmul.f32 %v793, %v797
  %799 = vrot.lane.b32.xlu0 %v738, 110
  %v800 = vpop.permute.xlu0 %799
  %v801 = vlaneseq
  %v802 = vshrl.u32 %v801, 7
  %v803 = vsub.s32 0, %v802
  %v804 = vrot.slane %v744, %v803
  %v805 = vmul.f32 %v800, %v804
  %807 = vset.pattern.permute.xlu0 0
  %808 = vperm.xlu0 %807, %v742
  %v809 = vpop.permute.xlu0 %808
  %v812 = vsel %vm355, %v741, 0
  %814 = vmatprep.subr.mxu0 0.0
  %815 = vmatpush1.msra.mxu0 %v751
  %816 = vmatprep.subr.mxu0 0.0
  %817 = vmatpush1.msra.mxu0 %v758
  %818 = vmatprep.subr.mxu0 0.0
  %819 = vmatpush1.msra.mxu0 %v765
  %820 = vmatprep.subr.mxu0 0.0
  %821 = vmatpush1.msra.mxu0 %v772
  %822 = vmatprep.subr.mxu0 0.0
  %823 = vmatpush1.msra.mxu0 %v777
  %824 = vmatprep.subr.mxu0 0.0
  %825 = vmatpush1.msra.mxu0 %v784
  %826 = vmatprep.subr.mxu0 0.0
  %827 = vmatpush1.msra.mxu0 %v791
  %828 = vmatprep.subr.mxu0 0.0
  %829 = vmatpush1.msra.mxu0 %v798
  %830 = vmatprep.subr.mxu0 0.0
  %831 = vmatpush1.msra.mxu0 %v805
  %832 = vmatprep.subr.mxu0 0.0
  %833 = vmatpush1.msra.mxu0 0.0
  %834 = vmatprep.subr.mxu0 0.0
  %835 = vmatpush1.msra.mxu0 0.0
  %836 = vmatprep.subr.mxu0 0.0
  %837 = vmatpush1.msra.mxu0 0.0
  %838 = vmatprep.subr.mxu0 0.0
  %839 = vmatpush1.msra.mxu0 0.0
  %840 = vmatprep.subr.mxu0 0.0
  %841 = vmatpush1.msra.mxu0 0.0
  %842 = vmatprep.subr.mxu0 0.0
  %843 = vmatpush1.msra.mxu0 0.0
  %844 = vmatprep.subr.mxu0 0.0
  %845 = vmatpush1.msra.mxu0 0.0
  %846 = vmatprep.subr.mxu0 0.0
  %847 = vmatpush1.msra.mxu0 0.0
  %848 = vmatprep.subr.mxu0 0.0
  %849 = vmatpush1.msra.mxu0 0.0
  %850 = vmatprep.subr.mxu0 0.0
  %851 = vmatpush1.msra.mxu0 0.0
  %852 = vmatprep.subr.mxu0 0.0
  %853 = vmatpush1.msra.mxu0 0.0
  %854 = vmatprep.subr.mxu0 0.0
  %855 = vmatpush1.msra.mxu0 0.0
  %856 = vmatprep.subr.mxu0 0.0
  %857 = vmatpush1.msra.mxu0 0.0
  %858 = vmatprep.subr.mxu0 0.0
  %859 = vmatpush1.msra.mxu0 0.0
  %860 = vmatprep.subr.mxu0 0.0
  %861 = vmatpush1.msra.mxu0 0.0
  %862 = vmatprep.subr.mxu0 0.0
  %863 = vmatpush1.msra.mxu0 0.0
  %864 = vmatprep.subr.mxu0 0.0
  %865 = vmatpush1.msra.mxu0 0.0
  %866 = vmatprep.subr.mxu0 0.0
  %867 = vmatpush1.msra.mxu0 0.0
  %868 = vmatprep.subr.mxu0 0.0
  %869 = vmatpush1.msra.mxu0 0.0
  %870 = vmatprep.subr.mxu0 0.0
  %871 = vmatpush1.msra.mxu0 0.0
  %872 = vmatprep.subr.mxu0 0.0
  %873 = vmatpush1.msra.mxu0 0.0
  %874 = vmatprep.subr.mxu0 0.0
  %875 = vmatpush1.msra.mxu0 0.0
  %876 = vmatprep.subr.mxu0 0.0
  %877 = vmatpush1.msra.mxu0 0.0
  %878 = vmatprep.mubr.f32.mxu0 0.0
  %879 = vmatmul.mubr.f32.gmra.mrb[0].mxu0 %v812
  %v880 = vpop.f32.mrb[0].mxu0
  %v881 = vadd.f32 %v809, %v880
  %v882 = vpop.f32.mrb[0].mxu0
  %883 = vdwg.mxu0
  %v884 = vmax.f32 %v881, 0.0
  %v885 = vld [vmem:[%s8] sm:$0xff]
  %v886 = vld [vmem:[%s8 + $0x8] sm:$0xff]
  %v887 = vld [vmem:[%s8 + $0x10] sm:$0xff]
  %v888 = vld [vmem:[%s8 + $0x18] sm:$0xff]
  %v889 = vld [vmem:[%s8 + $0x20] sm:$0xff]
  %v890 = vld [vmem:[%s8 + $0x28] sm:$0xff]
  %v891 = vld [vmem:[%s8 + $0x30] sm:$0xff]
  %v892 = vld [vmem:[%s8 + $0x38] sm:$0xff]
  %v893 = vld [vmem:[%s8 + $0x40] sm:$0xff]
  %v894 = vld [vmem:[%s8 + $0x48] sm:$0xff]
  %v895 = vld [vmem:[%s8 + $0x50] sm:$0xff]
  %v896 = vld [vmem:[%s8 + $0x58] sm:$0xff]
  %v897 = vld [vmem:[%s8 + $0x60] sm:$0xff]
  %v898 = vld [vmem:[%s8 + $0x68] sm:$0xff]
  %v899 = vld [vmem:[%s8 + $0x70] sm:$0xff]
  %v900 = vld [vmem:[%s8 + $0x78] sm:$0xff]
  %901 = vrot.lane.b32.xlu0 %v884, 126
  %v902 = vpop.permute.xlu0 %901
  %v903 = vmax.f32 %v884, %v902
  %904 = vrot.lane.b32.xlu0 %v903, 112
  %v905 = vpop.permute.xlu0 %904
  %v906 = vmax.f32 %v903, %v905
  %907 = vmatprep.subr.mxu0 0.0
  %908 = vmatpush1.msra.mxu0 %v885
  %909 = vmatprep.subr.mxu0 0.0
  %910 = vmatpush1.msra.mxu0 %v886
  %911 = vmatprep.subr.mxu0 0.0
  %912 = vmatpush1.msra.mxu0 %v887
  %913 = vmatprep.subr.mxu0 0.0
  %914 = vmatpush1.msra.mxu0 %v888
  %915 = vmatprep.subr.mxu0 0.0
  %916 = vmatpush1.msra.mxu0 %v889
  %917 = vmatprep.subr.mxu0 0.0
  %918 = vmatpush1.msra.mxu0 %v890
  %919 = vmatprep.subr.mxu0 0.0
  %920 = vmatpush1.msra.mxu0 %v891
  %921 = vmatprep.subr.mxu0 0.0
  %922 = vmatpush1.msra.mxu0 %v892
  %923 = vmatprep.subr.mxu0 0.0
  %924 = vmatpush1.msra.mxu0 %v893
  %925 = vmatprep.subr.mxu0 0.0
  %926 = vmatpush1.msra.mxu0 %v894
  %927 = vmatprep.subr.mxu0 0.0
  %928 = vmatpush1.msra.mxu0 %v895
  %929 = vmatprep.subr.mxu0 0.0
  %930 = vmatpush1.msra.mxu0 %v896
  %931 = vmatprep.subr.mxu0 0.0
  %932 = vmatpush1.msra.mxu0 %v897
  %933 = vmatprep.subr.mxu0 0.0
  %934 = vmatpush1.msra.mxu0 %v898
  %935 = vmatprep.subr.mxu0 0.0
  %936 = vmatpush1.msra.mxu0 %v899
  %937 = vmatprep.subr.mxu0 0.0
  %938 = vmatpush1.msra.mxu0 %v900
  %939 = vmatprep.subr.mxu0 0.0
  %940 = vmatpush1.msra.mxu0 0.0
  %941 = vmatprep.subr.mxu0 0.0
  %942 = vmatpush1.msra.mxu0 0.0
  %943 = vmatprep.subr.mxu0 0.0
  %944 = vmatpush1.msra.mxu0 0.0
  %945 = vmatprep.subr.mxu0 0.0
  %946 = vmatpush1.msra.mxu0 0.0
  %947 = vmatprep.subr.mxu0 0.0
  %948 = vmatpush1.msra.mxu0 0.0
  %949 = vmatprep.subr.mxu0 0.0
  %950 = vmatpush1.msra.mxu0 0.0
  %951 = vmatprep.subr.mxu0 0.0
  %952 = vmatpush1.msra.mxu0 0.0
  %953 = vmatprep.subr.mxu0 0.0
  %954 = vmatpush1.msra.mxu0 0.0
  %955 = vmatprep.subr.mxu0 0.0
  %956 = vmatpush1.msra.mxu0 0.0
  %957 = vmatprep.subr.mxu0 0.0
  %958 = vmatpush1.msra.mxu0 0.0
  %959 = vmatprep.subr.mxu0 0.0
  %960 = vmatpush1.msra.mxu0 0.0
  %961 = vmatprep.subr.mxu0 0.0
  %962 = vmatpush1.msra.mxu0 0.0
  %963 = vmatprep.subr.mxu0 0.0
  %964 = vmatpush1.msra.mxu0 0.0
  %965 = vmatprep.subr.mxu0 0.0
  %966 = vmatpush1.msra.mxu0 0.0
  %967 = vmatprep.subr.mxu0 0.0
  %968 = vmatpush1.msra.mxu0 0.0
  %969 = vmatprep.subr.mxu0 0.0
  %970 = vmatpush1.msra.mxu0 0.0
  %971 = vmatprep.mubr.f32.mxu0 0.0
  %972 = vmatmul.mubr.f32.gmra.mrb[0].mxu0 %v906
  %v973 = vpop.f32.mrb[0].mxu0
  %v974 = vadd.f32 0.0, %v973
  %v975 = vpop.f32.mrb[0].mxu0
  %976 = vdwg.mxu0
  %v977 = vld [vmem:[%s9] sm:$0xff]
  %v978 = vld [vmem:[%s10] sm:$0xff]
  %v979 = vld [vmem:[%s11] sm:$0xff]
  %v980 = vld [vmem:[%s11 + $0x8] sm:$0x1]
  %981 = vrot.lane.b32.xlu0 %v974, 10
  %v982 = vpop.permute.xlu0 %981
  %v983 = vlaneseq
  %v984 = vshrl.u32 %v983, 7
  %v985 = vsub.s32 0, %v984
  %v986 = vrot.slane %v979, %v985
  %v987 = vmul.f32 %v982, %v986
  %988 = vrot.lane.b32.xlu0 %v974, 8
  %v989 = vpop.permute.xlu0 %988
  %v990 = vlaneseq
  %v991 = vshrl.u32 %v990, 7
  %v992 = vsub.s32 1, %v991
  %v993 = vrot.slane %v979, %v992
  %v994 = vmul.f32 %v989, %v993
  %995 = vrot.lane.b32.xlu0 %v974, 6
  %v996 = vpop.permute.xlu0 %995
  %v997 = vlaneseq
  %v998 = vshrl.u32 %v997, 7
  %v999 = vsub.s32 2, %v998
  %v1000 = vrot.slane %v979, %v999
  %v1001 = vmul.f32 %v996, %v1000
  %1002 = vrot.lane.b32.xlu0 %v974, 2
  %v1003 = vpop.permute.xlu0 %1002
  %v1004 = vlaneseq
  %v1005 = vshrl.u32 %v1004, 7
  %v1006 = vsub.s32 3, %v1005
  %v1007 = vrot.slane %v979, %v1006
  %v1008 = vmul.f32 %v1003, %v1007
  %v1009 = vlaneseq
  %v1010 = vshrl.u32 %v1009, 7
  %v1011 = vsub.s32 4, %v1010
  %v1012 = vrot.slane %v979, %v1011
  %v1013 = vmul.f32 %v974, %v1012
  %1014 = vrot.lane.b32.xlu0 %v974, 126
  %v1015 = vpop.permute.xlu0 %1014
  %v1016 = vlaneseq
  %v1017 = vshrl.u32 %v1016, 7
  %v1018 = vsub.s32 5, %v1017
  %v1019 = vrot.slane %v979, %v1018
  %v1020 = vmul.f32 %v1015, %v1019
  %1021 = vrot.lane.b32.xlu0 %v974, 122
  %v1022 = vpop.permute.xlu0 %1021
  %v1023 = vlaneseq
  %v1024 = vshrl.u32 %v1023, 7
  %v1025 = vsub.s32 6, %v1024
  %v1026 = vrot.slane %v979, %v1025
  %v1027 = vmul.f32 %v1022, %v1026
  %1028 = vrot.lane.b32.xlu0 %v974, 120
  %v1029 = vpop.permute.xlu0 %1028
  %v1030 = vlaneseq
  %v1031 = vshrl.u32 %v1030, 7
  %v1032 = vsub.s32 7, %v1031
  %v1033 = vrot.slane %v979, %v1032
  %v1034 = vmul.f32 %v1029, %v1033
  %1035 = vrot.lane.b32.xlu0 %v974, 118
  %v1036 = vpop.permute.xlu0 %1035
  %v1037 = vlaneseq
  %v1038 = vshrl.u32 %v1037, 7
  %v1039 = vsub.s32 0, %v1038
  %v1040 = vrot.slane %v980, %v1039
  %v1041 = vmul.f32 %v1036, %v1040
  %1043 = vset.pattern.permute.xlu0 0
  %1044 = vperm.xlu0 %1043, %v978
  %v1045 = vpop.permute.xlu0 %1044
  %v1048 = vsel %vm355, %v977, 0
  %1050 = vmatprep.subr.mxu0 0.0
  %1051 = vmatpush1.msra.mxu0 %v987
  %1052 = vmatprep.subr.mxu0 0.0
  %1053 = vmatpush1.msra.mxu0 %v994
  %1054 = vmatprep.subr.mxu0 0.0
  %1055 = vmatpush1.msra.mxu0 %v1001
  %1056 = vmatprep.subr.mxu0 0.0
  %1057 = vmatpush1.msra.mxu0 %v1008
  %1058 = vmatprep.subr.mxu0 0.0
  %1059 = vmatpush1.msra.mxu0 %v1013
  %1060 = vmatprep.subr.mxu0 0.0
  %1061 = vmatpush1.msra.mxu0 %v1020
  %1062 = vmatprep.subr.mxu0 0.0
  %1063 = vmatpush1.msra.mxu0 %v1027
  %1064 = vmatprep.subr.mxu0 0.0
  %1065 = vmatpush1.msra.mxu0 %v1034
  %1066 = vmatprep.subr.mxu0 0.0
  %1067 = vmatpush1.msra.mxu0 %v1041
  %1068 = vmatprep.subr.mxu0 0.0
  %1069 = vmatpush1.msra.mxu0 0.0
  %1070 = vmatprep.subr.mxu0 0.0
  %1071 = vmatpush1.msra.mxu0 0.0
  %1072 = vmatprep.subr.mxu0 0.0
  %1073 = vmatpush1.msra.mxu0 0.0
  %1074 = vmatprep.subr.mxu0 0.0
  %1075 = vmatpush1.msra.mxu0 0.0
  %1076 = vmatprep.subr.mxu0 0.0
  %1077 = vmatpush1.msra.mxu0 0.0
  %1078 = vmatprep.subr.mxu0 0.0
  %1079 = vmatpush1.msra.mxu0 0.0
  %1080 = vmatprep.subr.mxu0 0.0
  %1081 = vmatpush1.msra.mxu0 0.0
  %1082 = vmatprep.subr.mxu0 0.0
  %1083 = vmatpush1.msra.mxu0 0.0
  %1084 = vmatprep.subr.mxu0 0.0
  %1085 = vmatpush1.msra.mxu0 0.0
  %1086 = vmatprep.subr.mxu0 0.0
  %1087 = vmatpush1.msra.mxu0 0.0
  %1088 = vmatprep.subr.mxu0 0.0
  %1089 = vmatpush1.msra.mxu0 0.0
  %1090 = vmatprep.subr.mxu0 0.0
  %1091 = vmatpush1.msra.mxu0 0.0
  %1092 = vmatprep.subr.mxu0 0.0
  %1093 = vmatpush1.msra.mxu0 0.0
  %1094 = vmatprep.subr.mxu0 0.0
  %1095 = vmatpush1.msra.mxu0 0.0
  %1096 = vmatprep.subr.mxu0 0.0
  %1097 = vmatpush1.msra.mxu0 0.0
  %1098 = vmatprep.subr.mxu0 0.0
  %1099 = vmatpush1.msra.mxu0 0.0
  %1100 = vmatprep.subr.mxu0 0.0
  %1101 = vmatpush1.msra.mxu0 0.0
  %1102 = vmatprep.subr.mxu0 0.0
  %1103 = vmatpush1.msra.mxu0 0.0
  %1104 = vmatprep.subr.mxu0 0.0
  %1105 = vmatpush1.msra.mxu0 0.0
  %1106 = vmatprep.subr.mxu0 0.0
  %1107 = vmatpush1.msra.mxu0 0.0
  %1108 = vmatprep.subr.mxu0 0.0
  %1109 = vmatpush1.msra.mxu0 0.0
  %1110 = vmatprep.subr.mxu0 0.0
  %1111 = vmatpush1.msra.mxu0 0.0
  %1112 = vmatprep.subr.mxu0 0.0
  %1113 = vmatpush1.msra.mxu0 0.0
  %1114 = vmatprep.mubr.f32.mxu0 0.0
  %1115 = vmatmul.mubr.f32.gmra.mrb[0].mxu0 %v1048
  %v1116 = vpop.f32.mrb[0].mxu0
  %v1117 = vadd.f32 %v1045, %v1116
  %v1118 = vpop.f32.mrb[0].mxu0
  %1119 = vdwg.mxu0
  %v1120 = vmax.f32 %v1117, 0.0
  %v1121 = vld [vmem:[%s12] sm:$0xff]
  %v1122 = vld [vmem:[%s12 + $0x8] sm:$0xff]
  %v1123 = vld [vmem:[%s12 + $0x10] sm:$0xff]
  %v1124 = vld [vmem:[%s12 + $0x18] sm:$0xff]
  %v1125 = vld [vmem:[%s12 + $0x20] sm:$0xff]
  %v1126 = vld [vmem:[%s12 + $0x28] sm:$0xff]
  %v1127 = vld [vmem:[%s12 + $0x30] sm:$0xff]
  %v1128 = vld [vmem:[%s12 + $0x38] sm:$0xff]
  %v1129 = vld [vmem:[%s12 + $0x40] sm:$0xff]
  %v1130 = vld [vmem:[%s12 + $0x48] sm:$0xff]
  %v1131 = vld [vmem:[%s12 + $0x50] sm:$0xff]
  %v1132 = vld [vmem:[%s12 + $0x58] sm:$0xff]
  %v1133 = vld [vmem:[%s12 + $0x60] sm:$0xff]
  %v1134 = vld [vmem:[%s12 + $0x68] sm:$0xff]
  %v1135 = vld [vmem:[%s12 + $0x70] sm:$0xff]
  %v1136 = vld [vmem:[%s12 + $0x78] sm:$0xff]
  %1137 = vrot.lane.b32.xlu0 %v1120, 126
  %v1138 = vpop.permute.xlu0 %1137
  %v1139 = vmax.f32 %v1120, %v1138
  %1140 = vrot.lane.b32.xlu0 %v1139, 120
  %v1141 = vpop.permute.xlu0 %1140
  %v1142 = vmax.f32 %v1139, %v1141
  %1143 = vmatprep.subr.mxu0 0.0
  %1144 = vmatpush1.msra.mxu0 %v1121
  %1145 = vmatprep.subr.mxu0 0.0
  %1146 = vmatpush1.msra.mxu0 %v1122
  %1147 = vmatprep.subr.mxu0 0.0
  %1148 = vmatpush1.msra.mxu0 %v1123
  %1149 = vmatprep.subr.mxu0 0.0
  %1150 = vmatpush1.msra.mxu0 %v1124
  %1151 = vmatprep.subr.mxu0 0.0
  %1152 = vmatpush1.msra.mxu0 %v1125
  %1153 = vmatprep.subr.mxu0 0.0
  %1154 = vmatpush1.msra.mxu0 %v1126
  %1155 = vmatprep.subr.mxu0 0.0
  %1156 = vmatpush1.msra.mxu0 %v1127
  %1157 = vmatprep.subr.mxu0 0.0
  %1158 = vmatpush1.msra.mxu0 %v1128
  %1159 = vmatprep.subr.mxu0 0.0
  %1160 = vmatpush1.msra.mxu0 %v1129
  %1161 = vmatprep.subr.mxu0 0.0
  %1162 = vmatpush1.msra.mxu0 %v1130
  %1163 = vmatprep.subr.mxu0 0.0
  %1164 = vmatpush1.msra.mxu0 %v1131
  %1165 = vmatprep.subr.mxu0 0.0
  %1166 = vmatpush1.msra.mxu0 %v1132
  %1167 = vmatprep.subr.mxu0 0.0
  %1168 = vmatpush1.msra.mxu0 %v1133
  %1169 = vmatprep.subr.mxu0 0.0
  %1170 = vmatpush1.msra.mxu0 %v1134
  %1171 = vmatprep.subr.mxu0 0.0
  %1172 = vmatpush1.msra.mxu0 %v1135
  %1173 = vmatprep.subr.mxu0 0.0
  %1174 = vmatpush1.msra.mxu0 %v1136
  %1175 = vmatprep.subr.mxu0 0.0
  %1176 = vmatpush1.msra.mxu0 0.0
  %1177 = vmatprep.subr.mxu0 0.0
  %1178 = vmatpush1.msra.mxu0 0.0
  %1179 = vmatprep.subr.mxu0 0.0
  %1180 = vmatpush1.msra.mxu0 0.0
  %1181 = vmatprep.subr.mxu0 0.0
  %1182 = vmatpush1.msra.mxu0 0.0
  %1183 = vmatprep.subr.mxu0 0.0
  %1184 = vmatpush1.msra.mxu0 0.0
  %1185 = vmatprep.subr.mxu0 0.0
  %1186 = vmatpush1.msra.mxu0 0.0
  %1187 = vmatprep.subr.mxu0 0.0
  %1188 = vmatpush1.msra.mxu0 0.0
  %1189 = vmatprep.subr.mxu0 0.0
  %1190 = vmatpush1.msra.mxu0 0.0
  %1191 = vmatprep.subr.mxu0 0.0
  %1192 = vmatpush1.msra.mxu0 0.0
  %1193 = vmatprep.subr.mxu0 0.0
  %1194 = vmatpush1.msra.mxu0 0.0
  %1195 = vmatprep.subr.mxu0 0.0
  %1196 = vmatpush1.msra.mxu0 0.0
  %1197 = vmatprep.subr.mxu0 0.0
  %1198 = vmatpush1.msra.mxu0 0.0
  %1199 = vmatprep.subr.mxu0 0.0
  %1200 = vmatpush1.msra.mxu0 0.0
  %1201 = vmatprep.subr.mxu0 0.0
  %1202 = vmatpush1.msra.mxu0 0.0
  %1203 = vmatprep.subr.mxu0 0.0
  %1204 = vmatpush1.msra.mxu0 0.0
  %1205 = vmatprep.subr.mxu0 0.0
  %1206 = vmatpush1.msra.mxu0 0.0
  %1207 = vmatprep.mubr.f32.mxu0 0.0
  %1208 = vmatmul.mubr.f32.gmra.mrb[0].mxu0 %v1142
  %v1209 = vpop.f32.mrb[0].mxu0
  %v1210 = vadd.f32 0.0, %v1209
  %v1211 = vpop.f32.mrb[0].mxu0
  %1212 = vdwg.mxu0
  %v1213 = vld [vmem:[%s13] sm:$0xff]
  %v1214 = vld [vmem:[%s13 + $0x8] sm:$0x3]
  %v1215 = vld [vmem:[%s14] sm:$0xff]
  %v1216 = vld [vmem:[%s14 + $0x8] sm:$0x3]
  %1218 = vrot.lane.b32.xlu0 %v1210, 126
  %v1219 = vpop.permute.xlu0 %1218
  %1221 = vrot.lane.b32.xlu0 %v1210, 124
  %v1222 = vpop.permute.xlu0 %1221
  %1224 = vrot.lane.b32.xlu0 %v1210, 122
  %v1225 = vpop.permute.xlu0 %1224
  %1228 = vset.pattern.permute.xlu0 0
  %1229 = vperm.xlu0 %1228, %v1215
  %v1230 = vpop.permute.xlu0 %1229
  %1233 = vset.pattern.permute.xlu0 0
  %1234 = vperm.xlu0 %1233, %v1216
  %v1235 = vpop.permute.xlu0 %1234
  %vm1237 = vcmask 261120
  %v1239 = vsel %vm1237, %v1213, 0
  %v1242 = vsel %vm1237, %v1214, 0
  %1244 = vmatprep.subr.mxu0 0.0
  %1245 = vmatpush1.msra.mxu0 %v1210
  %1246 = vmatprep.subr.mxu0 0.0
  %1247 = vmatpush1.msra.mxu0 %v1219
  %1248 = vmatprep.subr.mxu0 0.0
  %1249 = vmatpush1.msra.mxu0 %v1222
  %1250 = vmatprep.subr.mxu0 0.0
  %1251 = vmatpush1.msra.mxu0 %v1225
  %1252 = vmatprep.subr.mxu0 0.0
  %1253 = vmatpush1.msra.mxu0 0.0
  %1254 = vmatprep.subr.mxu0 0.0
  %1255 = vmatpush1.msra.mxu0 0.0
  %1256 = vmatprep.subr.mxu0 0.0
  %1257 = vmatpush1.msra.mxu0 0.0
  %1258 = vmatprep.subr.mxu0 0.0
  %1259 = vmatpush1.msra.mxu0 0.0
  %1260 = vmatprep.subr.mxu0 0.0
  %1261 = vmatpush1.msra.mxu0 0.0
  %1262 = vmatprep.subr.mxu0 0.0
  %1263 = vmatpush1.msra.mxu0 0.0
  %1264 = vmatprep.subr.mxu0 0.0
  %1265 = vmatpush1.msra.mxu0 0.0
  %1266 = vmatprep.subr.mxu0 0.0
  %1267 = vmatpush1.msra.mxu0 0.0
  %1268 = vmatprep.subr.mxu0 0.0
  %1269 = vmatpush1.msra.mxu0 0.0
  %1270 = vmatprep.subr.mxu0 0.0
  %1271 = vmatpush1.msra.mxu0 0.0
  %1272 = vmatprep.subr.mxu0 0.0
  %1273 = vmatpush1.msra.mxu0 0.0
  %1274 = vmatprep.subr.mxu0 0.0
  %1275 = vmatpush1.msra.mxu0 0.0
  %1276 = vmatprep.subr.mxu0 0.0
  %1277 = vmatpush1.msra.mxu0 0.0
  %1278 = vmatprep.subr.mxu0 0.0
  %1279 = vmatpush1.msra.mxu0 0.0
  %1280 = vmatprep.subr.mxu0 0.0
  %1281 = vmatpush1.msra.mxu0 0.0
  %1282 = vmatprep.subr.mxu0 0.0
  %1283 = vmatpush1.msra.mxu0 0.0
  %1284 = vmatprep.subr.mxu0 0.0
  %1285 = vmatpush1.msra.mxu0 0.0
  %1286 = vmatprep.subr.mxu0 0.0
  %1287 = vmatpush1.msra.mxu0 0.0
  %1288 = vmatprep.subr.mxu0 0.0
  %1289 = vmatpush1.msra.mxu0 0.0
  %1290 = vmatprep.subr.mxu0 0.0
  %1291 = vmatpush1.msra.mxu0 0.0
  %1292 = vmatprep.subr.mxu0 0.0
  %1293 = vmatpush1.msra.mxu0 0.0
  %1294 = vmatprep.subr.mxu0 0.0
  %1295 = vmatpush1.msra.mxu0 0.0
  %1296 = vmatprep.subr.mxu0 0.0
  %1297 = vmatpush1.msra.mxu0 0.0
  %1298 = vmatprep.subr.mxu0 0.0
  %1299 = vmatpush1.msra.mxu0 0.0
  %1300 = vmatprep.subr.mxu0 0.0
  %1301 = vmatpush1.msra.mxu0 0.0
  %1302 = vmatprep.subr.mxu0 0.0
  %1303 = vmatpush1.msra.mxu0 0.0
  %1304 = vmatprep.subr.mxu0 0.0
  %1305 = vmatpush1.msra.mxu0 0.0
  %1306 = vmatprep.subr.mxu0 0.0
  %1307 = vmatpush1.msra.mxu0 0.0
  %1308 = vmatprep.mubr.f32.mxu0 0.0
  %1309 = vmatmul.mubr.f32.gmra.mrb[0].mxu0 %v1239
  %v1310 = vpop.f32.mrb[0].mxu0
  %v1311 = vadd.f32 %v1230, %v1310
  %v1312 = vpop.f32.mrb[0].mxu0
  %1313 = vmatprep.mubr.f32.mxu0 0.0
  %1314 = vmatmul.mubr.f32.gmra.mrb[0].mxu0 %v1242
  %v1315 = vpop.f32.mrb[0].mxu0
  %v1316 = vadd.f32 %v1235, %v1315
  %v1317 = vpop.f32.mrb[0].mxu0
  %1318 = vdwg.mxu0
  %vm1319 = vcmask 15360
  %1320 = vst.msk [vmem:[%s15] sm:$0xff] %vm1319, %v1311
  %vm1321 = vcmask 9216
  %1322 = vst.msk [vmem:[%s15 + $0x8] sm:$0x3] %vm1321, %v1316
  // Predicated region
  $region62: #{fwd.1} parent=0 // pred_check
    _
  $region63: #{fwd.1} parent=0 // pred_check_branch
    %1324 = sbr.rel (0) target = $region65
  $region64: #{fwd.1} parent=0 // pred_region
    _
  $region65: #{fwd.1} parent=0 // pred_fallthru
    _
  // Predicated region
  $region66: #{fwd.1} parent=0 // pred_check
    _
  $region67: #{fwd.1} parent=0 // pred_check_branch
    %1326 = sbr.rel (0) target = $region69
  $region68: #{fwd.1} parent=0 // pred_region
    _
  $region69: #{fwd.1} parent=0 // pred_fallthru
    _

</llo_original>
